<compile_context>
chip_gen: v7x
topology: tpu7x:2x2x1
jax: 0.10.0
libtpu: 0.0.40
codegen_flags: <defaults>
</compile_context>

<pallas_src>
import functools
import math

import jax
import jax.numpy as jnp
from jax.experimental import pallas as pl
from jax.experimental.pallas import tpu as pltpu

# NOTE: matches the FCN_1D module's BatchNorm1d eps (1e-3).
# TODO(synk): confirm against the reference module (torch default is 1e-5).
_BN_EPS = 1e-3
_MXU_DTYPE = jnp.bfloat16          # MXU inputs; accumulation stays f32

# Fixed FCN_1D architecture constants (kernel size, replicate padding).
_K1, _PAD1 = 8, 4
_K2, _PAD2 = 5, 2
_K3, _PAD3 = 3, 1
_ALIGN = 8                         # pad-scratch body starts at sublane 8 (aligned)


# ---------------------------------------------------------------------------
# Fused kernel: conv1+BN+ReLU+SE -> conv2+BN+ReLU+SE -> conv3+BN+ReLU -> GAP
# ---------------------------------------------------------------------------
def _fcn_fused_kernel(
    xcol1_ref,                                   # (B*L, K1*Cin) bf16 (im2col of conv1)
    w1_ref, b1_ref, g1_ref, be1_ref,             # (K1*Cin, C1) bf16, (1,C1) f32 x3
    se1a_ref, se1b_ref,                          # (C1, C1//16), (C1//16, C1) bf16
    w2_ref, b2_ref, g2_ref, be2_ref,
    se2a_ref, se2b_ref,
    w3_ref, b3_ref, g3_ref, be3_ref,
    o_ref,                                       # (B, C3) f32
    pad2_ref, pad3_ref,                          # VMEM scratch: replicate-padded inputs
    *, B, L,
):
    n_rows = float(B * L)

    # -------------------- helpers (B, K static & small) ---------------------
    def batchnorm_relu(y, gamma, beta):
        # BatchNorm1d training-mode batch stats over all B*L rows, one pass.
        s = jnp.sum(y, axis=0, keepdims=True)
        ssq = jnp.sum(y * y, axis=0, keepdims=True)
        mean = s * (1.0 / n_rows)                                    # (1, C)
        var = jnp.maximum(ssq * (1.0 / n_rows) - mean * mean, 0.0)   # biased var
        scale = gamma * jax.lax.rsqrt(var + _BN_EPS)
        shift = beta - mean * scale
        return jnp.maximum(y * scale + shift, 0.0)

    def batch_gap(y):
        # Per-batch mean over L rows -> (B, C); slices are static.
        return jnp.concatenate(
            [jnp.mean(y[b * L:(b + 1) * L, :], axis=0, keepdims=True)
             for b in range(B)], axis=0)

    def squeeze_excite(y, wa, wb):
        # GAP over L -> FC -> ReLU -> FC -> sigmoid -> per-channel scale.
        C = y.shape[1]
        gap = batch_gap(y)                                           # (B, C) f32
        z = jnp.maximum(
            jnp.dot(gap.astype(_MXU_DTYPE), wa,
                    preferred_element_type=jnp.float32), 0.0)        # (B, C//16)
        e = jax.nn.sigmoid(
            jnp.dot(z.astype(_MXU_DTYPE), wb,
                    preferred_element_type=jnp.float32))             # (B, C)
        gate = jnp.concatenate(
            [jnp.broadcast_to(e[b:b + 1, :], (L, C)) for b in range(B)],
            axis=0)                                                  # (B*L, C)
        return y * gate

    def conv_layer(y, pad_ref, w_r, b_r, K, pad):
        # Replicate-pad along L into a sublane-aligned VMEM scratch, build the
        # flattened im2col from K shifted reads per batch, then ONE MXU matmul
        # with M=B*L and contraction K*C (f32 accumulation).
        w = w_r[...]                        # (K*C, Cout) bf16
        bias = b_r[...]                     # (1, Cout)  f32
        C = y.shape[1]
        for b in range(B):
            yb = y[b * L:(b + 1) * L, :]
            pad_ref[b, _ALIGN - pad:_ALIGN, :] = jnp.broadcast_to(
                yb[0:1, :], (pad, C))
            pad_ref[b, _ALIGN:_ALIGN + L, :] = yb                    # aligned body store
            pad_ref[b, _ALIGN + L:_ALIGN + L + pad, :] = jnp.broadcast_to(
                yb[L - 1:L, :], (pad, C))
        cols = jnp.concatenate(
            [jnp.concatenate(
                [pad_ref[b, _ALIGN - pad + k:_ALIGN - pad + k + L, :]
                 for k in range(K)], axis=1)                         # (L, K*C)
             for b in range(B)], axis=0)                             # (B*L, K*C)
        return jnp.dot(cols.astype(_MXU_DTYPE), w,
                       preferred_element_type=jnp.float32) + bias

    # -------------------- layer 1 (im2col built in the wrapper) -------------
    y = jnp.dot(xcol1_ref[...], w1_ref[...],
                preferred_element_type=jnp.float32) + b1_ref[...]    # (B*L, C1)
    y = batchnorm_relu(y, g1_ref[...], be1_ref[...])
    y = squeeze_excite(y, se1a_ref[...], se1b_ref[...])

    # -------------------- layer 2 --------------------------------------------
    y = conv_layer(y, pad2_ref, w2_ref, b2_ref, _K2, _PAD2)          # (B*L, C2)
    y = batchnorm_relu(y, g2_ref[...], be2_ref[...])
    y = squeeze_excite(y, se2a_ref[...], se2b_ref[...])

    # -------------------- layer 3 + global average pool ----------------------
    y = conv_layer(y, pad3_ref, w3_ref, b3_ref, _K3, _PAD3)          # (B*L, C3)
    y = batchnorm_relu(y, g3_ref[...], be3_ref[...])

    o_ref[...] = batch_gap(y)                                        # AdaptiveAvgPool1d(1)


# ---------------------------------------------------------------------------
# Wrapper
# ---------------------------------------------------------------------------
def _vmem():
    return pl.BlockSpec(memory_space=pltpu.MemorySpace.VMEM)


def fcn_1d_forward(seq, p):
    """seq: (B, S, C_in) float32 — channels-last view of the tensor FCN_1D receives."""
    B, S, Cin = seq.shape
    C1 = p["w1"].shape[2]
    C2 = p["w2"].shape[2]
    C3 = p["w3"].shape[2]
    L = S + 2 * _PAD1 - _K1 + 1          # length after conv1 (== S+1); conv2/3 keep it

    # conv1 im2col in the wrapper: replicate pad + K1 shifted slices stacked on
    # the channel axis, flattened to (B*L, K1*Cin) so the kernel does ONE dot.
    xpad = jnp.pad(seq, ((0, 0), (_PAD1, _PAD1), (0, 0)), mode="edge")
    xcol1 = jnp.concatenate([xpad[:, k:k + L, :] for k in range(_K1)], axis=2)
    xcol1 = xcol1.reshape(B * L, _K1 * Cin).astype(_MXU_DTYPE)

    def flat(w):                          # (K, Cin, Cout) -> (K*Cin, Cout), bf16
        K, ci, co = w.shape
        return w.reshape(K * ci, co).astype(_MXU_DTYPE)

    args = (
        xcol1,
        flat(p["w1"]), p["b1"], p["g1"], p["be1"],
        p["se1a"].astype(_MXU_DTYPE), p["se1b"].astype(_MXU_DTYPE),
        flat(p["w2"]), p["b2"], p["g2"], p["be2"],
        p["se2a"].astype(_MXU_DTYPE), p["se2b"].astype(_MXU_DTYPE),
        flat(p["w3"]), p["b3"], p["g3"], p["be3"],
    )

    flops = 2 * B * L * (_K1 * Cin * C1 + _K2 * C1 * C2 + _K3 * C2 * C3)
    flops += 2 * B * (2 * C1 * (C1 // 16) + 2 * C2 * (C2 // 16))
    bytes_accessed = sum(int(a.size) * a.dtype.itemsize for a in args) + B * C3 * 4
    cost = pl.CostEstimate(flops=flops,
                           transcendentals=B * (C1 + C2),
                           bytes_accessed=bytes_accessed)

    out = pl.pallas_call(
        functools.partial(_fcn_fused_kernel, B=B, L=L),
        out_shape=jax.ShapeDtypeStruct((B, C3), jnp.float32),
        in_specs=[_vmem() for _ in args],
        out_specs=_vmem(),
        scratch_shapes=[
            pltpu.VMEM((B, _ALIGN + L + _PAD2, C1), jnp.float32),  # padded y1
            pltpu.VMEM((B, _ALIGN + L + _PAD3, C2), jnp.float32),  # padded y2
        ],
        cost_estimate=cost,
    )(*args)

    return out[:, :, None]               # (B, 128, 1): matches torch FCN_1D output


# ---------------------------------------------------------------------------
# Pure-JAX reference (same precision policy) for correctness checking
# ---------------------------------------------------------------------------
def _ref_forward(seq, p):
    def conv(y, w, bias, K, pad):
        Kk, ci, co = w.shape
        Lo = y.shape[1] + 2 * pad - K + 1
        yp = jnp.pad(y, ((0, 0), (pad, pad), (0, 0)), mode="edge")
        cols = jnp.concatenate([yp[:, k:k + Lo, :] for k in range(K)], axis=2)
        wf = w.reshape(Kk * ci, co)
        out = jnp.einsum("blk,ko->blo", cols.astype(_MXU_DTYPE),
                         wf.astype(_MXU_DTYPE),
                         preferred_element_type=jnp.float32)
        return out + bias

    def bn_relu(y, g, be):
        n = y.shape[0] * y.shape[1]
        mean = jnp.sum(y, axis=(0, 1), keepdims=True) / n
        var = jnp.maximum(
            jnp.sum(y * y, axis=(0, 1), keepdims=True) / n - mean * mean, 0.0)
        scale = g.reshape(1, 1, -1) * jax.lax.rsqrt(var + _BN_EPS)
        shift = be.reshape(1, 1, -1) - mean * scale
        return jnp.maximum(y * scale + shift, 0.0)

    def se(y, wa, wb):
        gap = jnp.mean(y, axis=1)
        z = jnp.maximum(jnp.dot(gap.astype(_MXU_DTYPE), wa.astype(_MXU_DTYPE),
                                preferred_element_type=jnp.float32), 0.0)
        e = jax.nn.sigmoid(jnp.dot(z.astype(_MXU_DTYPE), wb.astype(_MXU_DTYPE),
                                   preferred_element_type=jnp.float32))
        return y * e[:, None, :]

    y = conv(seq, p["w1"], p["b1"], _K1, _PAD1)
    y = bn_relu(y, p["g1"], p["be1"])
    y = se(y, p["se1a"], p["se1b"])
    y = conv(y, p["w2"], p["b2"], _K2, _PAD2)
    y = bn_relu(y, p["g2"], p["be2"])
    y = se(y, p["se2a"], p["se2b"])
    y = conv(y, p["w3"], p["b3"], _K3, _PAD3)
    y = bn_relu(y, p["g3"], p["be3"])
    return jnp.mean(y, axis=1)[:, :, None]


# ---------------------------------------------------------------------------
# Deterministic parameter init (mirrors the module's shapes)
# ---------------------------------------------------------------------------
def init_params(key, in_channels, out_channels):
    c1, c2, c3 = out_channels, out_channels * 2, out_channels  # 128, 256, 128
    ks = jax.random.split(key, 10)

    def xavier_conv(k, cin, cout, ksz):
        bound = math.sqrt(6.0 / (cin * ksz + cout * ksz))
        return jax.random.uniform(k, (ksz, cin, cout), jnp.float32, -bound, bound)

    def conv_bias(k, cin, cout, ksz):
        bound = 1.0 / math.sqrt(cin * ksz)
        return jax.random.uniform(k, (1, cout), jnp.float32, -bound, bound)

    def linear_t(k, fin, fout):   # torch Linear weight transposed: (fin, fout)
        bound = 1.0 / math.sqrt(fin)
        return jax.random.uniform(k, (fin, fout), jnp.float32, -bound, bound)

    # TODO(synk): confirm the reference SE block's nn.Linear bias setting
    #             (bias-free assumed here, as in canonical SELayer ports).
    return {
        "w1": xavier_conv(ks[0], in_channels, c1, _K1),
        "b1": conv_bias(ks[1], in_channels, c1, _K1),
        "g1": jnp.ones((1, c1), jnp.float32),
        "be1": jnp.zeros((1, c1), jnp.float32),
        "se1a": linear_t(ks[2], c1, c1 // 16),
        "se1b": linear_t(ks[3], c1 // 16, c1),

        "w2": xavier_conv(ks[4], c1, c2, _K2),
        "b2": conv_bias(ks[5], c1, c2, _K2),
        "g2": jnp.ones((1, c2), jnp.float32),
        "be2": jnp.zeros((1, c2), jnp.float32),
        "se2a": linear_t(ks[6], c2, c2 // 16),
        "se2b": linear_t(ks[7], c2 // 16, c2),

        "w3": xavier_conv(ks[8], c2, c3, _K3),
        "b3": conv_bias(ks[9], c2, c3, _K3),
        "g3": jnp.ones((1, c3), jnp.float32),
        "be3": jnp.zeros((1, c3), jnp.float32),
    }


if __name__ == "__main__":
    key = jax.random.PRNGKey(0)
    kx, kp = jax.random.split(key)

    B, S, C_IN, C_OUT = 2, 16, 4, 128   # out_channels must be 128 (BN sizes in module)
    seq = jax.random.normal(kx, (B, S, C_IN), jnp.float32)
    params = init_params(kp, C_IN, C_OUT)

    out = jax.block_until_ready(fcn_1d_forward(seq, params))
    ref = jax.block_until_ready(_ref_forward(seq, params))

    assert out.shape == (B, 128, 1), out.shape
    assert bool(jnp.all(jnp.isfinite(out)))
    err = float(jnp.max(jnp.abs(out - ref)))
    assert err < 3e-2, f"kernel/reference mismatch: max|diff|={err}"
    print("KERNEL_OK")
</pallas_src>

<mosaic_0001>
module attributes {stable_mosaic.version = 11 : i64} {
  func.func @_fcn_fused_kernel(%arg0: memref<34x32xbf16, #tpu.memory_space<vmem>>, %arg1: memref<32x128xbf16, #tpu.memory_space<vmem>>, %arg2: memref<1x128xf32, #tpu.memory_space<vmem>>, %arg3: memref<1x128xf32, #tpu.memory_space<vmem>>, %arg4: memref<1x128xf32, #tpu.memory_space<vmem>>, %arg5: memref<128x8xbf16, #tpu.memory_space<vmem>>, %arg6: memref<8x128xbf16, #tpu.memory_space<vmem>>, %arg7: memref<640x256xbf16, #tpu.memory_space<vmem>>, %arg8: memref<1x256xf32, #tpu.memory_space<vmem>>, %arg9: memref<1x256xf32, #tpu.memory_space<vmem>>, %arg10: memref<1x256xf32, #tpu.memory_space<vmem>>, %arg11: memref<256x16xbf16, #tpu.memory_space<vmem>>, %arg12: memref<16x256xbf16, #tpu.memory_space<vmem>>, %arg13: memref<768x128xbf16, #tpu.memory_space<vmem>>, %arg14: memref<1x128xf32, #tpu.memory_space<vmem>>, %arg15: memref<1x128xf32, #tpu.memory_space<vmem>>, %arg16: memref<1x128xf32, #tpu.memory_space<vmem>>, %arg17: memref<2x128xf32, #tpu.memory_space<vmem>>, %arg18: memref<2x27x128xf32, #tpu.memory_space<vmem>>, %arg19: memref<2x26x256xf32, #tpu.memory_space<vmem>>) attributes {dimension_semantics = [], scalar_prefetch = 0 : i64, scratch_operands = 2 : i64, tpu.core_type = #tpu.core_type<tc>} {
    %c0 = arith.constant 0 : index
    %c0_0 = arith.constant 0 : index
    %0 = vector.load %arg0[%c0, %c0_0] : memref<34x32xbf16, #tpu.memory_space<vmem>>, vector<34x32xbf16>
    %c0_1 = arith.constant 0 : index
    %c0_2 = arith.constant 0 : index
    %1 = vector.load %arg1[%c0_1, %c0_2] : memref<32x128xbf16, #tpu.memory_space<vmem>>, vector<32x128xbf16>
    %cst = arith.constant dense<0.000000e+00> : vector<34x128xf32>
    %2 = tpu.matmul %0, %1, %cst {dimension_numbers = #tpu.dot_dimension_numbers<[1], [0], [0], [1], [0, 0, 1, 1], [], []>} : vector<34x32xbf16>, vector<32x128xbf16>, vector<34x128xf32> -> vector<34x128xf32>
    %c0_3 = arith.constant 0 : index
    %c0_4 = arith.constant 0 : index
    %3 = vector.load %arg2[%c0_3, %c0_4] : memref<1x128xf32, #tpu.memory_space<vmem>>, vector<1x128xf32>
    %4 = vector.broadcast %3 : vector<1x128xf32> to vector<34x128xf32>
    %5 = arith.addf %2, %4 : vector<34x128xf32>
    %c0_5 = arith.constant 0 : index
    %c0_6 = arith.constant 0 : index
    %6 = vector.load %arg3[%c0_5, %c0_6] : memref<1x128xf32, #tpu.memory_space<vmem>>, vector<1x128xf32>
    %c0_7 = arith.constant 0 : index
    %c0_8 = arith.constant 0 : index
    %7 = vector.load %arg4[%c0_7, %c0_8] : memref<1x128xf32, #tpu.memory_space<vmem>>, vector<1x128xf32>
    %cst_9 = arith.constant dense<0.000000e+00> : vector<128xf32>
    %8 = vector.multi_reduction <add>, %5, %cst_9 [0] : vector<34x128xf32> to vector<128xf32>
    %9 = vector.shape_cast %8 : vector<128xf32> to vector<1x128xf32>
    %10 = arith.mulf %5, %5 : vector<34x128xf32>
    %cst_10 = arith.constant dense<0.000000e+00> : vector<128xf32>
    %11 = vector.multi_reduction <add>, %10, %cst_10 [0] : vector<34x128xf32> to vector<128xf32>
    %12 = vector.shape_cast %11 : vector<128xf32> to vector<1x128xf32>
    %cst_11 = arith.constant 0.0294117648 : f32
    %13 = vector.broadcast %cst_11 : f32 to vector<1x128xf32>
    %14 = arith.mulf %9, %13 : vector<1x128xf32>
    %cst_12 = arith.constant 0.0294117648 : f32
    %15 = vector.broadcast %cst_12 : f32 to vector<1x128xf32>
    %16 = arith.mulf %12, %15 : vector<1x128xf32>
    %17 = arith.mulf %14, %14 : vector<1x128xf32>
    %18 = arith.subf %16, %17 : vector<1x128xf32>
    %cst_13 = arith.constant 0.000000e+00 : f32
    %19 = vector.broadcast %cst_13 : f32 to vector<1x128xf32>
    %20 = arith.maximumf %18, %19 : vector<1x128xf32>
    %cst_14 = arith.constant 1.000000e-03 : f32
    %21 = vector.broadcast %cst_14 : f32 to vector<1x128xf32>
    %22 = arith.addf %20, %21 : vector<1x128xf32>
    %23 = math.rsqrt %22 : vector<1x128xf32>
    %24 = arith.mulf %6, %23 : vector<1x128xf32>
    %25 = arith.mulf %14, %24 : vector<1x128xf32>
    %26 = arith.subf %7, %25 : vector<1x128xf32>
    %27 = vector.broadcast %24 : vector<1x128xf32> to vector<34x128xf32>
    %28 = arith.mulf %5, %27 : vector<34x128xf32>
    %29 = vector.broadcast %26 : vector<1x128xf32> to vector<34x128xf32>
    %30 = arith.addf %28, %29 : vector<34x128xf32>
    %cst_15 = arith.constant 0.000000e+00 : f32
    %31 = vector.broadcast %cst_15 : f32 to vector<34x128xf32>
    %32 = arith.maximumf %30, %31 : vector<34x128xf32>
    %c0_16 = arith.constant 0 : index
    %c0_17 = arith.constant 0 : index
    %33 = vector.load %arg5[%c0_16, %c0_17] : memref<128x8xbf16, #tpu.memory_space<vmem>>, vector<128x8xbf16>
    %c0_18 = arith.constant 0 : index
    %c0_19 = arith.constant 0 : index
    %34 = vector.load %arg6[%c0_18, %c0_19] : memref<8x128xbf16, #tpu.memory_space<vmem>>, vector<8x128xbf16>
    %35 = vector.extract_strided_slice %32 {offsets = [0, 0], sizes = [17, 128], strides = [1, 1]} : vector<34x128xf32> to vector<17x128xf32>
    %cst_20 = arith.constant dense<0.000000e+00> : vector<128xf32>
    %36 = vector.multi_reduction <add>, %35, %cst_20 [0] : vector<17x128xf32> to vector<128xf32>
    %37 = vector.shape_cast %36 : vector<128xf32> to vector<1x128xf32>
    %cst_21 = arith.constant 1.700000e+01 : f32
    %38 = vector.broadcast %cst_21 : f32 to vector<1x128xf32>
    %39 = arith.divf %37, %38 : vector<1x128xf32>
    %40 = vector.extract_strided_slice %32 {offsets = [17, 0], sizes = [17, 128], strides = [1, 1]} : vector<34x128xf32> to vector<17x128xf32>
    %cst_22 = arith.constant dense<0.000000e+00> : vector<128xf32>
    %41 = vector.multi_reduction <add>, %40, %cst_22 [0] : vector<17x128xf32> to vector<128xf32>
    %42 = vector.shape_cast %41 : vector<128xf32> to vector<1x128xf32>
    %cst_23 = arith.constant 1.700000e+01 : f32
    %43 = vector.broadcast %cst_23 : f32 to vector<1x128xf32>
    %44 = arith.divf %42, %43 : vector<1x128xf32>
    %45 = tpu.concatenate %39, %44 in 0 : vector<1x128xf32>, vector<1x128xf32> -> vector<2x128xf32>
    %46 = arith.truncf %45 : vector<2x128xf32> to vector<2x128xbf16>
    %cst_24 = arith.constant dense<0.000000e+00> : vector<2x8xf32>
    %47 = tpu.matmul %46, %33, %cst_24 {dimension_numbers = #tpu.dot_dimension_numbers<[1], [0], [0], [1], [0, 0, 1, 1], [], []>} : vector<2x128xbf16>, vector<128x8xbf16>, vector<2x8xf32> -> vector<2x8xf32>
    %cst_25 = arith.constant 0.000000e+00 : f32
    %48 = vector.broadcast %cst_25 : f32 to vector<2x8xf32>
    %49 = arith.maximumf %47, %48 : vector<2x8xf32>
    %50 = arith.truncf %49 : vector<2x8xf32> to vector<2x8xbf16>
    %cst_26 = arith.constant dense<0.000000e+00> : vector<2x128xf32>
    %51 = tpu.matmul %50, %34, %cst_26 {dimension_numbers = #tpu.dot_dimension_numbers<[1], [0], [0], [1], [0, 0, 1, 1], [], []>} : vector<2x8xbf16>, vector<8x128xbf16>, vector<2x128xf32> -> vector<2x128xf32>
    %52 = arith.negf %51 : vector<2x128xf32>
    %53 = math.exp %52 : vector<2x128xf32>
    %cst_27 = arith.constant 1.000000e+00 : f32
    %54 = vector.broadcast %cst_27 : f32 to vector<2x128xf32>
    %55 = arith.addf %54, %53 : vector<2x128xf32>
    %56 = arith.divf %54, %55 : vector<2x128xf32>
    %57 = vector.extract_strided_slice %56 {offsets = [0, 0], sizes = [1, 128], strides = [1, 1]} : vector<2x128xf32> to vector<1x128xf32>
    %58 = vector.shape_cast %57 : vector<1x128xf32> to vector<1x128xf32>
    %59 = vector.broadcast %58 : vector<1x128xf32> to vector<17x128xf32>
    %60 = vector.extract_strided_slice %56 {offsets = [1, 0], sizes = [1, 128], strides = [1, 1]} : vector<2x128xf32> to vector<1x128xf32>
    %61 = vector.shape_cast %60 : vector<1x128xf32> to vector<1x128xf32>
    %62 = vector.broadcast %61 : vector<1x128xf32> to vector<17x128xf32>
    %63 = tpu.concatenate %59, %62 in 0 : vector<17x128xf32>, vector<17x128xf32> -> vector<34x128xf32>
    %64 = arith.mulf %32, %63 : vector<34x128xf32>
    %c0_28 = arith.constant 0 : index
    %c0_29 = arith.constant 0 : index
    %65 = vector.load %arg7[%c0_28, %c0_29] : memref<640x256xbf16, #tpu.memory_space<vmem>>, vector<640x256xbf16>
    %c0_30 = arith.constant 0 : index
    %c0_31 = arith.constant 0 : index
    %66 = vector.load %arg8[%c0_30, %c0_31] : memref<1x256xf32, #tpu.memory_space<vmem>>, vector<1x256xf32>
    %67 = vector.extract_strided_slice %64 {offsets = [0, 0], sizes = [17, 128], strides = [1, 1]} : vector<34x128xf32> to vector<17x128xf32>
    %68 = vector.extract_strided_slice %67 {offsets = [0, 0], sizes = [1, 128], strides = [1, 1]} : vector<17x128xf32> to vector<1x128xf32>
    %69 = vector.shape_cast %68 : vector<1x128xf32> to vector<1x128xf32>
    %70 = vector.broadcast %69 : vector<1x128xf32> to vector<2x128xf32>
    %c0_32 = arith.constant 0 : index
    %c6 = arith.constant 6 : index
    %c0_33 = arith.constant 0 : index
    %71 = vector.load %arg18[%c0_32, %c6, %c0_33] : memref<2x27x128xf32, #tpu.memory_space<vmem>>, vector<1x2x128xf32>
    %72 = vector.shape_cast %71 : vector<1x2x128xf32> to vector<2x128xf32>
    %73 = vector.shape_cast %70 : vector<2x128xf32> to vector<1x2x128xf32>
    tpu.vector_store %arg18[%c0_32, %c6, %c0_33], %73 {strides = array<i32>} : memref<2x27x128xf32, #tpu.memory_space<vmem>>, vector<1x2x128xf32>,
    %c0_34 = arith.constant 0 : index
    %c8 = arith.constant 8 : index
    %c0_35 = arith.constant 0 : index
    %74 = vector.load %arg18[%c0_34, %c8, %c0_35] : memref<2x27x128xf32, #tpu.memory_space<vmem>>, vector<1x17x128xf32>
    %75 = vector.shape_cast %74 : vector<1x17x128xf32> to vector<17x128xf32>
    %76 = vector.shape_cast %67 : vector<17x128xf32> to vector<1x17x128xf32>
    tpu.vector_store %arg18[%c0_34, %c8, %c0_35], %76 {strides = array<i32>} : memref<2x27x128xf32, #tpu.memory_space<vmem>>, vector<1x17x128xf32>,
    %77 = vector.extract_strided_slice %67 {offsets = [16, 0], sizes = [1, 128], strides = [1, 1]} : vector<17x128xf32> to vector<1x128xf32>
    %78 = vector.shape_cast %77 : vector<1x128xf32> to vector<1x128xf32>
    %79 = vector.broadcast %78 : vector<1x128xf32> to vector<2x128xf32>
    %c0_36 = arith.constant 0 : index
    %c25 = arith.constant 25 : index
    %c0_37 = arith.constant 0 : index
    %80 = vector.load %arg18[%c0_36, %c25, %c0_37] : memref<2x27x128xf32, #tpu.memory_space<vmem>>, vector<1x2x128xf32>
    %81 = vector.shape_cast %80 : vector<1x2x128xf32> to vector<2x128xf32>
    %82 = vector.shape_cast %79 : vector<2x128xf32> to vector<1x2x128xf32>
    tpu.vector_store %arg18[%c0_36, %c25, %c0_37], %82 {strides = array<i32>} : memref<2x27x128xf32, #tpu.memory_space<vmem>>, vector<1x2x128xf32>,
    %83 = vector.extract_strided_slice %64 {offsets = [17, 0], sizes = [17, 128], strides = [1, 1]} : vector<34x128xf32> to vector<17x128xf32>
    %84 = vector.extract_strided_slice %83 {offsets = [0, 0], sizes = [1, 128], strides = [1, 1]} : vector<17x128xf32> to vector<1x128xf32>
    %85 = vector.shape_cast %84 : vector<1x128xf32> to vector<1x128xf32>
    %86 = vector.broadcast %85 : vector<1x128xf32> to vector<2x128xf32>
    %c1 = arith.constant 1 : index
    %c6_38 = arith.constant 6 : index
    %c0_39 = arith.constant 0 : index
    %87 = vector.load %arg18[%c1, %c6_38, %c0_39] : memref<2x27x128xf32, #tpu.memory_space<vmem>>, vector<1x2x128xf32>
    %88 = vector.shape_cast %87 : vector<1x2x128xf32> to vector<2x128xf32>
    %89 = vector.shape_cast %86 : vector<2x128xf32> to vector<1x2x128xf32>
    tpu.vector_store %arg18[%c1, %c6_38, %c0_39], %89 {strides = array<i32>} : memref<2x27x128xf32, #tpu.memory_space<vmem>>, vector<1x2x128xf32>,
    %c1_40 = arith.constant 1 : index
    %c8_41 = arith.constant 8 : index
    %c0_42 = arith.constant 0 : index
    %90 = vector.load %arg18[%c1_40, %c8_41, %c0_42] : memref<2x27x128xf32, #tpu.memory_space<vmem>>, vector<1x17x128xf32>
    %91 = vector.shape_cast %90 : vector<1x17x128xf32> to vector<17x128xf32>
    %92 = vector.shape_cast %83 : vector<17x128xf32> to vector<1x17x128xf32>
    tpu.vector_store %arg18[%c1_40, %c8_41, %c0_42], %92 {strides = array<i32>} : memref<2x27x128xf32, #tpu.memory_space<vmem>>, vector<1x17x128xf32>,
    %93 = vector.extract_strided_slice %83 {offsets = [16, 0], sizes = [1, 128], strides = [1, 1]} : vector<17x128xf32> to vector<1x128xf32>
    %94 = vector.shape_cast %93 : vector<1x128xf32> to vector<1x128xf32>
    %95 = vector.broadcast %94 : vector<1x128xf32> to vector<2x128xf32>
    %c1_43 = arith.constant 1 : index
    %c25_44 = arith.constant 25 : index
    %c0_45 = arith.constant 0 : index
    %96 = vector.load %arg18[%c1_43, %c25_44, %c0_45] : memref<2x27x128xf32, #tpu.memory_space<vmem>>, vector<1x2x128xf32>
    %97 = vector.shape_cast %96 : vector<1x2x128xf32> to vector<2x128xf32>
    %98 = vector.shape_cast %95 : vector<2x128xf32> to vector<1x2x128xf32>
    tpu.vector_store %arg18[%c1_43, %c25_44, %c0_45], %98 {strides = array<i32>} : memref<2x27x128xf32, #tpu.memory_space<vmem>>, vector<1x2x128xf32>,
    %c0_46 = arith.constant 0 : index
    %c6_47 = arith.constant 6 : index
    %c0_48 = arith.constant 0 : index
    %99 = vector.load %arg18[%c0_46, %c6_47, %c0_48] : memref<2x27x128xf32, #tpu.memory_space<vmem>>, vector<1x17x128xf32>
    %100 = vector.shape_cast %99 : vector<1x17x128xf32> to vector<17x128xf32>
    %c0_49 = arith.constant 0 : index
    %c7 = arith.constant 7 : index
    %c0_50 = arith.constant 0 : index
    %101 = vector.load %arg18[%c0_49, %c7, %c0_50] : memref<2x27x128xf32, #tpu.memory_space<vmem>>, vector<1x17x128xf32>
    %102 = vector.shape_cast %101 : vector<1x17x128xf32> to vector<17x128xf32>
    %c0_51 = arith.constant 0 : index
    %c8_52 = arith.constant 8 : index
    %c0_53 = arith.constant 0 : index
    %103 = vector.load %arg18[%c0_51, %c8_52, %c0_53] : memref<2x27x128xf32, #tpu.memory_space<vmem>>, vector<1x17x128xf32>
    %104 = vector.shape_cast %103 : vector<1x17x128xf32> to vector<17x128xf32>
    %c0_54 = arith.constant 0 : index
    %c9 = arith.constant 9 : index
    %c0_55 = arith.constant 0 : index
    %105 = vector.load %arg18[%c0_54, %c9, %c0_55] : memref<2x27x128xf32, #tpu.memory_space<vmem>>, vector<1x17x128xf32>
    %106 = vector.shape_cast %105 : vector<1x17x128xf32> to vector<17x128xf32>
    %c0_56 = arith.constant 0 : index
    %c10 = arith.constant 10 : index
    %c0_57 = arith.constant 0 : index
    %107 = vector.load %arg18[%c0_56, %c10, %c0_57] : memref<2x27x128xf32, #tpu.memory_space<vmem>>, vector<1x17x128xf32>
    %108 = vector.shape_cast %107 : vector<1x17x128xf32> to vector<17x128xf32>
    %109 = tpu.concatenate %100, %102, %104, %106, %108 in 1 : vector<17x128xf32>, vector<17x128xf32>, vector<17x128xf32>, vector<17x128xf32>, vector<17x128xf32> -> vector<17x640xf32>
    %c1_58 = arith.constant 1 : index
    %c6_59 = arith.constant 6 : index
    %c0_60 = arith.constant 0 : index
    %110 = vector.load %arg18[%c1_58, %c6_59, %c0_60] : memref<2x27x128xf32, #tpu.memory_space<vmem>>, vector<1x17x128xf32>
    %111 = vector.shape_cast %110 : vector<1x17x128xf32> to vector<17x128xf32>
    %c1_61 = arith.constant 1 : index
    %c7_62 = arith.constant 7 : index
    %c0_63 = arith.constant 0 : index
    %112 = vector.load %arg18[%c1_61, %c7_62, %c0_63] : memref<2x27x128xf32, #tpu.memory_space<vmem>>, vector<1x17x128xf32>
    %113 = vector.shape_cast %112 : vector<1x17x128xf32> to vector<17x128xf32>
    %c1_64 = arith.constant 1 : index
    %c8_65 = arith.constant 8 : index
    %c0_66 = arith.constant 0 : index
    %114 = vector.load %arg18[%c1_64, %c8_65, %c0_66] : memref<2x27x128xf32, #tpu.memory_space<vmem>>, vector<1x17x128xf32>
    %115 = vector.shape_cast %114 : vector<1x17x128xf32> to vector<17x128xf32>
    %c1_67 = arith.constant 1 : index
    %c9_68 = arith.constant 9 : index
    %c0_69 = arith.constant 0 : index
    %116 = vector.load %arg18[%c1_67, %c9_68, %c0_69] : memref<2x27x128xf32, #tpu.memory_space<vmem>>, vector<1x17x128xf32>
    %117 = vector.shape_cast %116 : vector<1x17x128xf32> to vector<17x128xf32>
    %c1_70 = arith.constant 1 : index
    %c10_71 = arith.constant 10 : index
    %c0_72 = arith.constant 0 : index
    %118 = vector.load %arg18[%c1_70, %c10_71, %c0_72] : memref<2x27x128xf32, #tpu.memory_space<vmem>>, vector<1x17x128xf32>
    %119 = vector.shape_cast %118 : vector<1x17x128xf32> to vector<17x128xf32>
    %120 = tpu.concatenate %111, %113, %115, %117, %119 in 1 : vector<17x128xf32>, vector<17x128xf32>, vector<17x128xf32>, vector<17x128xf32>, vector<17x128xf32> -> vector<17x640xf32>
    %121 = tpu.concatenate %109, %120 in 0 : vector<17x640xf32>, vector<17x640xf32> -> vector<34x640xf32>
    %122 = arith.truncf %121 : vector<34x640xf32> to vector<34x640xbf16>
    %cst_73 = arith.constant dense<0.000000e+00> : vector<34x256xf32>
    %123 = tpu.matmul %122, %65, %cst_73 {dimension_numbers = #tpu.dot_dimension_numbers<[1], [0], [0], [1], [0, 0, 1, 1], [], []>} : vector<34x640xbf16>, vector<640x256xbf16>, vector<34x256xf32> -> vector<34x256xf32>
    %124 = vector.broadcast %66 : vector<1x256xf32> to vector<34x256xf32>
    %125 = arith.addf %123, %124 : vector<34x256xf32>
    %c0_74 = arith.constant 0 : index
    %c0_75 = arith.constant 0 : index
    %126 = vector.load %arg9[%c0_74, %c0_75] : memref<1x256xf32, #tpu.memory_space<vmem>>, vector<1x256xf32>
    %c0_76 = arith.constant 0 : index
    %c0_77 = arith.constant 0 : index
    %127 = vector.load %arg10[%c0_76, %c0_77] : memref<1x256xf32, #tpu.memory_space<vmem>>, vector<1x256xf32>
    %cst_78 = arith.constant dense<0.000000e+00> : vector<256xf32>
    %128 = vector.multi_reduction <add>, %125, %cst_78 [0] : vector<34x256xf32> to vector<256xf32>
    %129 = vector.shape_cast %128 : vector<256xf32> to vector<1x256xf32>
    %130 = arith.mulf %125, %125 : vector<34x256xf32>
    %cst_79 = arith.constant dense<0.000000e+00> : vector<256xf32>
    %131 = vector.multi_reduction <add>, %130, %cst_79 [0] : vector<34x256xf32> to vector<256xf32>
    %132 = vector.shape_cast %131 : vector<256xf32> to vector<1x256xf32>
    %cst_80 = arith.constant 0.0294117648 : f32
    %133 = vector.broadcast %cst_80 : f32 to vector<1x256xf32>
    %134 = arith.mulf %129, %133 : vector<1x256xf32>
    %cst_81 = arith.constant 0.0294117648 : f32
    %135 = vector.broadcast %cst_81 : f32 to vector<1x256xf32>
    %136 = arith.mulf %132, %135 : vector<1x256xf32>
    %137 = arith.mulf %134, %134 : vector<1x256xf32>
    %138 = arith.subf %136, %137 : vector<1x256xf32>
    %cst_82 = arith.constant 0.000000e+00 : f32
    %139 = vector.broadcast %cst_82 : f32 to vector<1x256xf32>
    %140 = arith.maximumf %138, %139 : vector<1x256xf32>
    %cst_83 = arith.constant 1.000000e-03 : f32
    %141 = vector.broadcast %cst_83 : f32 to vector<1x256xf32>
    %142 = arith.addf %140, %141 : vector<1x256xf32>
    %143 = math.rsqrt %142 : vector<1x256xf32>
    %144 = arith.mulf %126, %143 : vector<1x256xf32>
    %145 = arith.mulf %134, %144 : vector<1x256xf32>
    %146 = arith.subf %127, %145 : vector<1x256xf32>
    %147 = vector.broadcast %144 : vector<1x256xf32> to vector<34x256xf32>
    %148 = arith.mulf %125, %147 : vector<34x256xf32>
    %149 = vector.broadcast %146 : vector<1x256xf32> to vector<34x256xf32>
    %150 = arith.addf %148, %149 : vector<34x256xf32>
    %cst_84 = arith.constant 0.000000e+00 : f32
    %151 = vector.broadcast %cst_84 : f32 to vector<34x256xf32>
    %152 = arith.maximumf %150, %151 : vector<34x256xf32>
    %c0_85 = arith.constant 0 : index
    %c0_86 = arith.constant 0 : index
    %153 = vector.load %arg11[%c0_85, %c0_86] : memref<256x16xbf16, #tpu.memory_space<vmem>>, vector<256x16xbf16>
    %c0_87 = arith.constant 0 : index
    %c0_88 = arith.constant 0 : index
    %154 = vector.load %arg12[%c0_87, %c0_88] : memref<16x256xbf16, #tpu.memory_space<vmem>>, vector<16x256xbf16>
    %155 = vector.extract_strided_slice %152 {offsets = [0, 0], sizes = [17, 256], strides = [1, 1]} : vector<34x256xf32> to vector<17x256xf32>
    %cst_89 = arith.constant dense<0.000000e+00> : vector<256xf32>
    %156 = vector.multi_reduction <add>, %155, %cst_89 [0] : vector<17x256xf32> to vector<256xf32>
    %157 = vector.shape_cast %156 : vector<256xf32> to vector<1x256xf32>
    %cst_90 = arith.constant 1.700000e+01 : f32
    %158 = vector.broadcast %cst_90 : f32 to vector<1x256xf32>
    %159 = arith.divf %157, %158 : vector<1x256xf32>
    %160 = vector.extract_strided_slice %152 {offsets = [17, 0], sizes = [17, 256], strides = [1, 1]} : vector<34x256xf32> to vector<17x256xf32>
    %cst_91 = arith.constant dense<0.000000e+00> : vector<256xf32>
    %161 = vector.multi_reduction <add>, %160, %cst_91 [0] : vector<17x256xf32> to vector<256xf32>
    %162 = vector.shape_cast %161 : vector<256xf32> to vector<1x256xf32>
    %cst_92 = arith.constant 1.700000e+01 : f32
    %163 = vector.broadcast %cst_92 : f32 to vector<1x256xf32>
    %164 = arith.divf %162, %163 : vector<1x256xf32>
    %165 = tpu.concatenate %159, %164 in 0 : vector<1x256xf32>, vector<1x256xf32> -> vector<2x256xf32>
    %166 = arith.truncf %165 : vector<2x256xf32> to vector<2x256xbf16>
    %cst_93 = arith.constant dense<0.000000e+00> : vector<2x16xf32>
    %167 = tpu.matmul %166, %153, %cst_93 {dimension_numbers = #tpu.dot_dimension_numbers<[1], [0], [0], [1], [0, 0, 1, 1], [], []>} : vector<2x256xbf16>, vector<256x16xbf16>, vector<2x16xf32> -> vector<2x16xf32>
    %cst_94 = arith.constant 0.000000e+00 : f32
    %168 = vector.broadcast %cst_94 : f32 to vector<2x16xf32>
    %169 = arith.maximumf %167, %168 : vector<2x16xf32>
    %170 = arith.truncf %169 : vector<2x16xf32> to vector<2x16xbf16>
    %cst_95 = arith.constant dense<0.000000e+00> : vector<2x256xf32>
    %171 = tpu.matmul %170, %154, %cst_95 {dimension_numbers = #tpu.dot_dimension_numbers<[1], [0], [0], [1], [0, 0, 1, 1], [], []>} : vector<2x16xbf16>, vector<16x256xbf16>, vector<2x256xf32> -> vector<2x256xf32>
    %172 = arith.negf %171 : vector<2x256xf32>
    %173 = math.exp %172 : vector<2x256xf32>
    %cst_96 = arith.constant 1.000000e+00 : f32
    %174 = vector.broadcast %cst_96 : f32 to vector<2x256xf32>
    %175 = arith.addf %174, %173 : vector<2x256xf32>
    %176 = arith.divf %174, %175 : vector<2x256xf32>
    %177 = vector.extract_strided_slice %176 {offsets = [0, 0], sizes = [1, 256], strides = [1, 1]} : vector<2x256xf32> to vector<1x256xf32>
    %178 = vector.shape_cast %177 : vector<1x256xf32> to vector<1x256xf32>
    %179 = vector.broadcast %178 : vector<1x256xf32> to vector<17x256xf32>
    %180 = vector.extract_strided_slice %176 {offsets = [1, 0], sizes = [1, 256], strides = [1, 1]} : vector<2x256xf32> to vector<1x256xf32>
    %181 = vector.shape_cast %180 : vector<1x256xf32> to vector<1x256xf32>
    %182 = vector.broadcast %181 : vector<1x256xf32> to vector<17x256xf32>
    %183 = tpu.concatenate %179, %182 in 0 : vector<17x256xf32>, vector<17x256xf32> -> vector<34x256xf32>
    %184 = arith.mulf %152, %183 : vector<34x256xf32>
    %c0_97 = arith.constant 0 : index
    %c0_98 = arith.constant 0 : index
    %185 = vector.load %arg13[%c0_97, %c0_98] : memref<768x128xbf16, #tpu.memory_space<vmem>>, vector<768x128xbf16>
    %c0_99 = arith.constant 0 : index
    %c0_100 = arith.constant 0 : index
    %186 = vector.load %arg14[%c0_99, %c0_100] : memref<1x128xf32, #tpu.memory_space<vmem>>, vector<1x128xf32>
    %187 = vector.extract_strided_slice %184 {offsets = [0, 0], sizes = [17, 256], strides = [1, 1]} : vector<34x256xf32> to vector<17x256xf32>
    %188 = vector.extract_strided_slice %187 {offsets = [0, 0], sizes = [1, 256], strides = [1, 1]} : vector<17x256xf32> to vector<1x256xf32>
    %c0_101 = arith.constant 0 : index
    %c7_102 = arith.constant 7 : index
    %c0_103 = arith.constant 0 : index
    %189 = vector.load %arg19[%c0_101, %c7_102, %c0_103] : memref<2x26x256xf32, #tpu.memory_space<vmem>>, vector<1x1x256xf32>
    %190 = vector.shape_cast %189 : vector<1x1x256xf32> to vector<1x256xf32>
    %191 = vector.shape_cast %188 : vector<1x256xf32> to vector<1x1x256xf32>
    tpu.vector_store %arg19[%c0_101, %c7_102, %c0_103], %191 {strides = array<i32>} : memref<2x26x256xf32, #tpu.memory_space<vmem>>, vector<1x1x256xf32>,
    %c0_104 = arith.constant 0 : index
    %c8_105 = arith.constant 8 : index
    %c0_106 = arith.constant 0 : index
    %192 = vector.load %arg19[%c0_104, %c8_105, %c0_106] : memref<2x26x256xf32, #tpu.memory_space<vmem>>, vector<1x17x256xf32>
    %193 = vector.shape_cast %192 : vector<1x17x256xf32> to vector<17x256xf32>
    %194 = vector.shape_cast %187 : vector<17x256xf32> to vector<1x17x256xf32>
    tpu.vector_store %arg19[%c0_104, %c8_105, %c0_106], %194 {strides = array<i32>} : memref<2x26x256xf32, #tpu.memory_space<vmem>>, vector<1x17x256xf32>,
    %195 = vector.extract_strided_slice %187 {offsets = [16, 0], sizes = [1, 256], strides = [1, 1]} : vector<17x256xf32> to vector<1x256xf32>
    %c0_107 = arith.constant 0 : index
    %c25_108 = arith.constant 25 : index
    %c0_109 = arith.constant 0 : index
    %196 = vector.load %arg19[%c0_107, %c25_108, %c0_109] : memref<2x26x256xf32, #tpu.memory_space<vmem>>, vector<1x1x256xf32>
    %197 = vector.shape_cast %196 : vector<1x1x256xf32> to vector<1x256xf32>
    %198 = vector.shape_cast %195 : vector<1x256xf32> to vector<1x1x256xf32>
    tpu.vector_store %arg19[%c0_107, %c25_108, %c0_109], %198 {strides = array<i32>} : memref<2x26x256xf32, #tpu.memory_space<vmem>>, vector<1x1x256xf32>,
    %199 = vector.extract_strided_slice %184 {offsets = [17, 0], sizes = [17, 256], strides = [1, 1]} : vector<34x256xf32> to vector<17x256xf32>
    %200 = vector.extract_strided_slice %199 {offsets = [0, 0], sizes = [1, 256], strides = [1, 1]} : vector<17x256xf32> to vector<1x256xf32>
    %c1_110 = arith.constant 1 : index
    %c7_111 = arith.constant 7 : index
    %c0_112 = arith.constant 0 : index
    %201 = vector.load %arg19[%c1_110, %c7_111, %c0_112] : memref<2x26x256xf32, #tpu.memory_space<vmem>>, vector<1x1x256xf32>
    %202 = vector.shape_cast %201 : vector<1x1x256xf32> to vector<1x256xf32>
    %203 = vector.shape_cast %200 : vector<1x256xf32> to vector<1x1x256xf32>
    tpu.vector_store %arg19[%c1_110, %c7_111, %c0_112], %203 {strides = array<i32>} : memref<2x26x256xf32, #tpu.memory_space<vmem>>, vector<1x1x256xf32>,
    %c1_113 = arith.constant 1 : index
    %c8_114 = arith.constant 8 : index
    %c0_115 = arith.constant 0 : index
    %204 = vector.load %arg19[%c1_113, %c8_114, %c0_115] : memref<2x26x256xf32, #tpu.memory_space<vmem>>, vector<1x17x256xf32>
    %205 = vector.shape_cast %204 : vector<1x17x256xf32> to vector<17x256xf32>
    %206 = vector.shape_cast %199 : vector<17x256xf32> to vector<1x17x256xf32>
    tpu.vector_store %arg19[%c1_113, %c8_114, %c0_115], %206 {strides = array<i32>} : memref<2x26x256xf32, #tpu.memory_space<vmem>>, vector<1x17x256xf32>,
    %207 = vector.extract_strided_slice %199 {offsets = [16, 0], sizes = [1, 256], strides = [1, 1]} : vector<17x256xf32> to vector<1x256xf32>
    %c1_116 = arith.constant 1 : index
    %c25_117 = arith.constant 25 : index
    %c0_118 = arith.constant 0 : index
    %208 = vector.load %arg19[%c1_116, %c25_117, %c0_118] : memref<2x26x256xf32, #tpu.memory_space<vmem>>, vector<1x1x256xf32>
    %209 = vector.shape_cast %208 : vector<1x1x256xf32> to vector<1x256xf32>
    %210 = vector.shape_cast %207 : vector<1x256xf32> to vector<1x1x256xf32>
    tpu.vector_store %arg19[%c1_116, %c25_117, %c0_118], %210 {strides = array<i32>} : memref<2x26x256xf32, #tpu.memory_space<vmem>>, vector<1x1x256xf32>,
    %c0_119 = arith.constant 0 : index
    %c7_120 = arith.constant 7 : index
    %c0_121 = arith.constant 0 : index
    %211 = vector.load %arg19[%c0_119, %c7_120, %c0_121] : memref<2x26x256xf32, #tpu.memory_space<vmem>>, vector<1x17x256xf32>
    %212 = vector.shape_cast %211 : vector<1x17x256xf32> to vector<17x256xf32>
    %c0_122 = arith.constant 0 : index
    %c8_123 = arith.constant 8 : index
    %c0_124 = arith.constant 0 : index
    %213 = vector.load %arg19[%c0_122, %c8_123, %c0_124] : memref<2x26x256xf32, #tpu.memory_space<vmem>>, vector<1x17x256xf32>
    %214 = vector.shape_cast %213 : vector<1x17x256xf32> to vector<17x256xf32>
    %c0_125 = arith.constant 0 : index
    %c9_126 = arith.constant 9 : index
    %c0_127 = arith.constant 0 : index
    %215 = vector.load %arg19[%c0_125, %c9_126, %c0_127] : memref<2x26x256xf32, #tpu.memory_space<vmem>>, vector<1x17x256xf32>
    %216 = vector.shape_cast %215 : vector<1x17x256xf32> to vector<17x256xf32>
    %217 = tpu.concatenate %212, %214, %216 in 1 : vector<17x256xf32>, vector<17x256xf32>, vector<17x256xf32> -> vector<17x768xf32>
    %c1_128 = arith.constant 1 : index
    %c7_129 = arith.constant 7 : index
    %c0_130 = arith.constant 0 : index
    %218 = vector.load %arg19[%c1_128, %c7_129, %c0_130] : memref<2x26x256xf32, #tpu.memory_space<vmem>>, vector<1x17x256xf32>
    %219 = vector.shape_cast %218 : vector<1x17x256xf32> to vector<17x256xf32>
    %c1_131 = arith.constant 1 : index
    %c8_132 = arith.constant 8 : index
    %c0_133 = arith.constant 0 : index
    %220 = vector.load %arg19[%c1_131, %c8_132, %c0_133] : memref<2x26x256xf32, #tpu.memory_space<vmem>>, vector<1x17x256xf32>
    %221 = vector.shape_cast %220 : vector<1x17x256xf32> to vector<17x256xf32>
    %c1_134 = arith.constant 1 : index
    %c9_135 = arith.constant 9 : index
    %c0_136 = arith.constant 0 : index
    %222 = vector.load %arg19[%c1_134, %c9_135, %c0_136] : memref<2x26x256xf32, #tpu.memory_space<vmem>>, vector<1x17x256xf32>
    %223 = vector.shape_cast %222 : vector<1x17x256xf32> to vector<17x256xf32>
    %224 = tpu.concatenate %219, %221, %223 in 1 : vector<17x256xf32>, vector<17x256xf32>, vector<17x256xf32> -> vector<17x768xf32>
    %225 = tpu.concatenate %217, %224 in 0 : vector<17x768xf32>, vector<17x768xf32> -> vector<34x768xf32>
    %226 = arith.truncf %225 : vector<34x768xf32> to vector<34x768xbf16>
    %cst_137 = arith.constant dense<0.000000e+00> : vector<34x128xf32>
    %227 = tpu.matmul %226, %185, %cst_137 {dimension_numbers = #tpu.dot_dimension_numbers<[1], [0], [0], [1], [0, 0, 1, 1], [], []>} : vector<34x768xbf16>, vector<768x128xbf16>, vector<34x128xf32> -> vector<34x128xf32>
    %228 = vector.broadcast %186 : vector<1x128xf32> to vector<34x128xf32>
    %229 = arith.addf %227, %228 : vector<34x128xf32>
    %c0_138 = arith.constant 0 : index
    %c0_139 = arith.constant 0 : index
    %230 = vector.load %arg15[%c0_138, %c0_139] : memref<1x128xf32, #tpu.memory_space<vmem>>, vector<1x128xf32>
    %c0_140 = arith.constant 0 : index
    %c0_141 = arith.constant 0 : index
    %231 = vector.load %arg16[%c0_140, %c0_141] : memref<1x128xf32, #tpu.memory_space<vmem>>, vector<1x128xf32>
    %cst_142 = arith.constant dense<0.000000e+00> : vector<128xf32>
    %232 = vector.multi_reduction <add>, %229, %cst_142 [0] : vector<34x128xf32> to vector<128xf32>
    %233 = vector.shape_cast %232 : vector<128xf32> to vector<1x128xf32>
    %234 = arith.mulf %229, %229 : vector<34x128xf32>
    %cst_143 = arith.constant dense<0.000000e+00> : vector<128xf32>
    %235 = vector.multi_reduction <add>, %234, %cst_143 [0] : vector<34x128xf32> to vector<128xf32>
    %236 = vector.shape_cast %235 : vector<128xf32> to vector<1x128xf32>
    %cst_144 = arith.constant 0.0294117648 : f32
    %237 = vector.broadcast %cst_144 : f32 to vector<1x128xf32>
    %238 = arith.mulf %233, %237 : vector<1x128xf32>
    %cst_145 = arith.constant 0.0294117648 : f32
    %239 = vector.broadcast %cst_145 : f32 to vector<1x128xf32>
    %240 = arith.mulf %236, %239 : vector<1x128xf32>
    %241 = arith.mulf %238, %238 : vector<1x128xf32>
    %242 = arith.subf %240, %241 : vector<1x128xf32>
    %cst_146 = arith.constant 0.000000e+00 : f32
    %243 = vector.broadcast %cst_146 : f32 to vector<1x128xf32>
    %244 = arith.maximumf %242, %243 : vector<1x128xf32>
    %cst_147 = arith.constant 1.000000e-03 : f32
    %245 = vector.broadcast %cst_147 : f32 to vector<1x128xf32>
    %246 = arith.addf %244, %245 : vector<1x128xf32>
    %247 = math.rsqrt %246 : vector<1x128xf32>
    %248 = arith.mulf %230, %247 : vector<1x128xf32>
    %249 = arith.mulf %238, %248 : vector<1x128xf32>
    %250 = arith.subf %231, %249 : vector<1x128xf32>
    %251 = vector.broadcast %248 : vector<1x128xf32> to vector<34x128xf32>
    %252 = arith.mulf %229, %251 : vector<34x128xf32>
    %253 = vector.broadcast %250 : vector<1x128xf32> to vector<34x128xf32>
    %254 = arith.addf %252, %253 : vector<34x128xf32>
    %cst_148 = arith.constant 0.000000e+00 : f32
    %255 = vector.broadcast %cst_148 : f32 to vector<34x128xf32>
    %256 = arith.maximumf %254, %255 : vector<34x128xf32>
    %257 = vector.extract_strided_slice %256 {offsets = [0, 0], sizes = [17, 128], strides = [1, 1]} : vector<34x128xf32> to vector<17x128xf32>
    %cst_149 = arith.constant dense<0.000000e+00> : vector<128xf32>
    %258 = vector.multi_reduction <add>, %257, %cst_149 [0] : vector<17x128xf32> to vector<128xf32>
    %259 = vector.shape_cast %258 : vector<128xf32> to vector<1x128xf32>
    %cst_150 = arith.constant 1.700000e+01 : f32
    %260 = vector.broadcast %cst_150 : f32 to vector<1x128xf32>
    %261 = arith.divf %259, %260 : vector<1x128xf32>
    %262 = vector.extract_strided_slice %256 {offsets = [17, 0], sizes = [17, 128], strides = [1, 1]} : vector<34x128xf32> to vector<17x128xf32>
    %cst_151 = arith.constant dense<0.000000e+00> : vector<128xf32>
    %263 = vector.multi_reduction <add>, %262, %cst_151 [0] : vector<17x128xf32> to vector<128xf32>
    %264 = vector.shape_cast %263 : vector<128xf32> to vector<1x128xf32>
    %cst_152 = arith.constant 1.700000e+01 : f32
    %265 = vector.broadcast %cst_152 : f32 to vector<1x128xf32>
    %266 = arith.divf %264, %265 : vector<1x128xf32>
    %267 = tpu.concatenate %261, %266 in 0 : vector<1x128xf32>, vector<1x128xf32> -> vector<2x128xf32>
    %c0_153 = arith.constant 0 : index
    %c0_154 = arith.constant 0 : index
    %268 = vector.load %arg17[%c0_153, %c0_154] : memref<2x128xf32, #tpu.memory_space<vmem>>, vector<2x128xf32>
    tpu.vector_store %arg17[%c0_153, %c0_154], %267 {strides = array<i32>} : memref<2x128xf32, #tpu.memory_space<vmem>>, vector<2x128xf32>,
    return
  }
}

</mosaic_0001>

<llo_original>
// kernel: tpu_custom_call.1
$region0: #{tpu_custom_call.1}
  #allocation0 [shape = 'u32[]', space=smem, size = 0x4, offset = 0x4, fixed_abs, tag = 'smem constant byte address 0x4 - core index']
  #allocation1 [shape = 'u32[144,128]{1,0:T(1,128)}', space=vmem, size = 0x12000, scoped, tag = 'internal scratch']
  #allocation2 [shape = 'f32[2,27,128]{2,1,0:T(8,128)}', space=vmem, size = 0x8000, scoped, tag = 'scratch operand']
  #allocation3 [shape = 'f32[2,26,256]{2,1,0:T(8,128)}', space=vmem, size = 0x10000, scoped, tag = 'scratch operand']
  %s0 = inlined_call_operand.vmem [shape: bf16[34,32], index: 0, kind: input, shape index: {}]
  %s1 = inlined_call_operand.vmem [shape: bf16[32,128], index: 1, kind: input, shape index: {}]
  %s2 = inlined_call_operand.vmem [shape: f32[1,128], index: 2, kind: input, shape index: {}]
  %s3 = inlined_call_operand.vmem [shape: f32[1,128], index: 3, kind: input, shape index: {}]
  %s4 = inlined_call_operand.vmem [shape: f32[1,128], index: 4, kind: input, shape index: {}]
  %s5 = inlined_call_operand.vmem [shape: bf16[128,8], index: 5, kind: input, shape index: {}]
  %s6 = inlined_call_operand.vmem [shape: bf16[8,128], index: 6, kind: input, shape index: {}]
  %s7 = inlined_call_operand.hbm [shape: bf16[640,256], index: 7, kind: input, shape index: {}]
  %s8 = inlined_call_operand.vmem [shape: f32[1,256], index: 8, kind: input, shape index: {}]
  %s9 = inlined_call_operand.vmem [shape: f32[1,256], index: 9, kind: input, shape index: {}]
  %s10 = inlined_call_operand.vmem [shape: f32[1,256], index: 10, kind: input, shape index: {}]
  %s11 = inlined_call_operand.vmem [shape: bf16[256,16], index: 11, kind: input, shape index: {}]
  %s12 = inlined_call_operand.vmem [shape: bf16[16,256], index: 12, kind: input, shape index: {}]
  %s13 = inlined_call_operand.hbm [shape: bf16[768,128], index: 13, kind: input, shape index: {}]
  %s14 = inlined_call_operand.vmem [shape: f32[1,128], index: 14, kind: input, shape index: {}]
  %s15 = inlined_call_operand.vmem [shape: f32[1,128], index: 15, kind: input, shape index: {}]
  %s16 = inlined_call_operand.vmem [shape: f32[1,128], index: 16, kind: input, shape index: {}]
  %s17 = inlined_call_operand.hbm [shape: f32[2,128], index: 17, kind: output, shape index: {}]
  %s18 = sld [smem:[#allocation0]]
  $region86: #{tpu_custom_call.1} parent=0
    _
  %s20 = ssub.s32 1, %s18
  %s21 = scalar_select 0, %s20, %s18
  $region1: #{tpu_custom_call.1} parent=0
    #allocation4 [shape = 'u8[327680]{0}', space=vmem, size = 0x50000, scoped, tag = 'input window, operand 7, single buffered']
    #allocation5 [shape = 's32[1]{0}', space=sflag, size = 0x4, scoped, tag = 'scoped memory for tpu_custom_call.1']
    #allocation6 [shape = 's32[1]{0}', space=sflag, size = 0x4, scoped, tag = 'scoped memory for tpu_custom_call.1']
    #allocation7 [shape = 'u8[196608]{0}', space=vmem, size = 0x30000, scoped, tag = 'input window, operand 13, single buffered']
    #allocation8 [shape = 's32[1]{0}', space=sflag, size = 0x4, scoped, tag = 'scoped memory for tpu_custom_call.1']
    #allocation9 [shape = 'u8[1024]{0}', space=vmem, size = 0x400, scoped, tag = 'output window, operand 0, single buffered']
    %22 = vsyncpa [#allocation5], 0
    %23 = vsyncpa [#allocation8], 0
    %24 = vsyncpa [#allocation6], 0
    // Predicated region
    $region2: #{tpu_custom_call.1} parent=1 // pred_check
      _
    $region3: #{tpu_custom_call.1} parent=1 // pred_check_branch
      %26 = sbr.rel (0) target = $region5
    $region4: #{tpu_custom_call.1} parent=1 // pred_region
      _
    $region5: #{tpu_custom_call.1} parent=1 // pred_fallthru
      _
    // Predicated region
    $region6: #{tpu_custom_call.1} parent=1 // pred_check
      _
    $region7: #{tpu_custom_call.1} parent=1 // pred_check_branch
      %28 = sbr.rel (0) target = $region9
    $region8: #{tpu_custom_call.1} parent=1 // pred_region
      _
    $region9: #{tpu_custom_call.1} parent=1 // pred_fallthru
      _
    // Predicated region
    $region10: #{tpu_custom_call.1} parent=1 // pred_check
      _
    $region11: #{tpu_custom_call.1} parent=1 // pred_check_branch
      %30 = sbr.rel (0) target = $region13
    $region12: #{tpu_custom_call.1} parent=1 // pred_region
      _
    $region13: #{tpu_custom_call.1} parent=1 // pred_fallthru
      _
    // Predicated region
    $region14: #{tpu_custom_call.1} parent=1 // pred_check
      _
    $region15: #{tpu_custom_call.1} parent=1 // pred_check_branch
      %32 = sbr.rel (0) target = $region17
    $region16: #{tpu_custom_call.1} parent=1 // pred_region
      _
    $region17: #{tpu_custom_call.1} parent=1 // pred_fallthru
      _
    // Predicated region
    $region18: #{tpu_custom_call.1} parent=1 // pred_check
      _
    $region19: #{tpu_custom_call.1} parent=1 // pred_check_branch
      %34 = sbr.rel (0) target = $region21
    $region20: #{tpu_custom_call.1} parent=1 // pred_region
      _
    $region21: #{tpu_custom_call.1} parent=1 // pred_fallthru
      _
    // Predicated region
    $region22: #{tpu_custom_call.1} parent=1 // pred_check
      _
    $region23: #{tpu_custom_call.1} parent=1 // pred_check_branch
      %36 = sbr.rel (0) target = $region25
    $region24: #{tpu_custom_call.1} parent=1 // pred_region
      _
    $region25: #{tpu_custom_call.1} parent=1 // pred_fallthru
      _
    // Predicated region
    $region26: #{tpu_custom_call.1} parent=1 // pred_check
      _
    $region27: #{tpu_custom_call.1} parent=1 // pred_check_branch
      %38 = sbr.rel (0) target = $region29
    $region28: #{tpu_custom_call.1} parent=1 // pred_region
      _
    $region29: #{tpu_custom_call.1} parent=1 // pred_fallthru
      _
    // Predicated region
    $region30: #{tpu_custom_call.1} parent=1 // pred_check
      _
    $region31: #{tpu_custom_call.1} parent=1 // pred_check_branch
      %40 = sbr.rel (0) target = $region33
    $region32: #{tpu_custom_call.1} parent=1 // pred_region
      %s42 = ssub.s32 10240, 10240
      %43 = vsyncadd [#allocation5], %s42
      %s44 = sshll.u32 [#allocation4], 4
      %s45 = int_to_ptr.vmem [resolvable:$true] %s44
      %50 = dma.hbm_to_vmem [thread:$0]  %s7, 10240, %s45, [#allocation5], 128, 128, 8
    $region33: #{tpu_custom_call.1} parent=1 // pred_fallthru
      _
    // Predicated region
    $region34: #{tpu_custom_call.1} parent=1 // pred_check
      _
    $region35: #{tpu_custom_call.1} parent=1 // pred_check_branch
      %52 = sbr.rel (0) target = $region37
    $region36: #{tpu_custom_call.1} parent=1 // pred_region
      _
    $region37: #{tpu_custom_call.1} parent=1 // pred_fallthru
      _
    // Predicated region
    $region38: #{tpu_custom_call.1} parent=1 // pred_check
      _
    $region39: #{tpu_custom_call.1} parent=1 // pred_check_branch
      %54 = sbr.rel (0) target = $region41
    $region40: #{tpu_custom_call.1} parent=1 // pred_region
      _
    $region41: #{tpu_custom_call.1} parent=1 // pred_fallthru
      _
    // Predicated region
    $region42: #{tpu_custom_call.1} parent=1 // pred_check
      _
    $region43: #{tpu_custom_call.1} parent=1 // pred_check_branch
      %56 = sbr.rel (0) target = $region45
    $region44: #{tpu_custom_call.1} parent=1 // pred_region
      _
    $region45: #{tpu_custom_call.1} parent=1 // pred_fallthru
      _
    // Predicated region
    $region46: #{tpu_custom_call.1} parent=1 // pred_check
      _
    $region47: #{tpu_custom_call.1} parent=1 // pred_check_branch
      %58 = sbr.rel (0) target = $region49
    $region48: #{tpu_custom_call.1} parent=1 // pred_region
      _
    $region49: #{tpu_custom_call.1} parent=1 // pred_fallthru
      _
    // Predicated region
    $region50: #{tpu_custom_call.1} parent=1 // pred_check
      _
    $region51: #{tpu_custom_call.1} parent=1 // pred_check_branch
      %60 = sbr.rel (0) target = $region53
    $region52: #{tpu_custom_call.1} parent=1 // pred_region
      _
    $region53: #{tpu_custom_call.1} parent=1 // pred_fallthru
      _
    // Predicated region
    $region54: #{tpu_custom_call.1} parent=1 // pred_check
      _
    $region55: #{tpu_custom_call.1} parent=1 // pred_check_branch
      %62 = sbr.rel (0) target = $region57
    $region56: #{tpu_custom_call.1} parent=1 // pred_region
      %s64 = ssub.s32 6144, 6144
      %65 = vsyncadd [#allocation8], %s64
      %s66 = sshll.u32 [#allocation7], 4
      %s67 = int_to_ptr.vmem [resolvable:$true] %s66
      %72 = dma.hbm_to_vmem [thread:$0]  %s13, 6144, %s67, [#allocation8], 64, 64, 4
    $region57: #{tpu_custom_call.1} parent=1 // pred_fallthru
      _
    // Predicated region
    $region58: #{tpu_custom_call.1} parent=1 // pred_check
      _
    $region59: #{tpu_custom_call.1} parent=1 // pred_check_branch
      %74 = sbr.rel (0) target = $region61
    $region60: #{tpu_custom_call.1} parent=1 // pred_region
      _
    $region61: #{tpu_custom_call.1} parent=1 // pred_fallthru
      _
    // Predicated region
    $region62: #{tpu_custom_call.1} parent=1 // pred_check
      _
    $region63: #{tpu_custom_call.1} parent=1 // pred_check_branch
      %76 = sbr.rel (0) target = $region65
    $region64: #{tpu_custom_call.1} parent=1 // pred_region
      _
    $region65: #{tpu_custom_call.1} parent=1 // pred_fallthru
      _
    // Predicated region
    $region66: #{tpu_custom_call.1} parent=1 // pred_check
      _
    $region67: #{tpu_custom_call.1} parent=1 // pred_check_branch
      %78 = sbr.rel (0) target = $region69
    $region68: #{tpu_custom_call.1} parent=1 // pred_region
      _
    $region69: #{tpu_custom_call.1} parent=1 // pred_fallthru
      _
    // Predicated region
    $region70: #{tpu_custom_call.1} parent=1 // pred_check
      _
    $region71: #{tpu_custom_call.1} parent=1 // pred_check_branch
      %80 = sbr.rel (0) target = $region73
    $region72: #{tpu_custom_call.1} parent=1 // pred_region
      %81 = dma.done [#allocation5], 10240
    $region73: #{tpu_custom_call.1} parent=1 // pred_fallthru
      _
    // Predicated region
    $region74: #{tpu_custom_call.1} parent=1 // pred_check
      _
    $region75: #{tpu_custom_call.1} parent=1 // pred_check_branch
      %83 = sbr.rel (0) target = $region77
    $region76: #{tpu_custom_call.1} parent=1 // pred_region
      %84 = dma.done [#allocation8], 6144
    $region77: #{tpu_custom_call.1} parent=1 // pred_fallthru
      _
    %v86 = vld [vmem:[%s0] sm:$0xf]
    %v87 = vld [vmem:[%s0 + $0x4] sm:$0xf]
    %v88 = vld [vmem:[%s0 + $0x8] sm:$0xf]
    %v89 = vld [vmem:[%s0 + $0xc] sm:$0xf]
    %v90 = vld [vmem:[%s0 + $0x10] sm:$0x1]
    %v91 = vld [vmem:[%s1] sm:$0xf]
    %v92 = vld [vmem:[%s1 + $0x4] sm:$0xf]
    %v93 = vld [vmem:[%s1 + $0x8] sm:$0xf]
    %v94 = vld [vmem:[%s1 + $0xc] sm:$0xf]
    %v95 = vld [vmem:[%s2] sm:$0x1]
    %v97 = vlaneseq
    %v98 = vshrl.u32 %v97, 7
    %v99 = vsub.s32 0, %v98
    %v100 = vrot.slane %v95, %v99
    %v107 = vunpack.c.l.b16 %v86
    %v108 = vunpack.c.l.b16 %v87
    %v109 = vunpack.c.l.b16 %v88
    %v110 = vunpack.c.l.b16 %v89
    %v111 = vunpack.c.l.b16 %v90
    %v112 = vpack.c.b16 %v108, %v107
    %v113 = vpack.c.b16 %v110, %v109
    %v114 = vpack.c.b16 %v111, %v111
    %v119 = vunpack.c.l.b16 %v91
    %v120 = vunpack.c.l.b16 %v92
    %v121 = vunpack.c.l.b16 %v93
    %v122 = vunpack.c.l.b16 %v94
    %v123 = vpack.c.b16 %v120, %v119
    %v124 = vpack.c.b16 %v122, %v121
    %vm127 = vcmask 261120
    %v129 = vsel %vm127, %v112, 0
    %v132 = vsel %vm127, %v113, 0
    %v135 = vsel %vm127, %v114, 0
    %137 = vmatprep.subr.bf16.mxu0 0
    %138 = vmatpush1.bf16.msra.mxu0 %v123
    %139 = vmatprep.subr.bf16.mxu0 0
    %140 = vmatpush1.bf16.msra.mxu0 %v124
    %141 = vmatprep.subr.bf16.mxu0 0
    %142 = vmatpush1.bf16.msra.mxu0 0
    %143 = vmatprep.subr.bf16.mxu0 0
    %144 = vmatpush1.bf16.msra.mxu0 0
    %145 = vmatprep.subr.bf16.mxu0 0
    %146 = vmatpush1.bf16.msra.mxu0 0
    %147 = vmatprep.subr.bf16.mxu0 0
    %148 = vmatpush1.bf16.msra.mxu0 0
    %149 = vmatprep.subr.bf16.mxu0 0
    %150 = vmatpush1.bf16.msra.mxu0 0
    %151 = vmatprep.subr.bf16.mxu0 0
    %152 = vmatpush1.bf16.msra.mxu0 0
    %153 = vmatprep.subr.bf16.mxu0 0
    %154 = vmatpush1.bf16.msra.mxu0 0
    %155 = vmatprep.subr.bf16.mxu0 0
    %156 = vmatpush1.bf16.msra.mxu0 0
    %157 = vmatprep.subr.bf16.mxu0 0
    %158 = vmatpush1.bf16.msra.mxu0 0
    %159 = vmatprep.subr.bf16.mxu0 0
    %160 = vmatpush1.bf16.msra.mxu0 0
    %161 = vmatprep.subr.bf16.mxu0 0
    %162 = vmatpush1.bf16.msra.mxu0 0
    %163 = vmatprep.subr.bf16.mxu0 0
    %164 = vmatpush1.bf16.msra.mxu0 0
    %165 = vmatprep.subr.bf16.mxu0 0
    %166 = vmatpush1.bf16.msra.mxu0 0
    %167 = vmatprep.subr.bf16.mxu0 0
    %168 = vmatpush1.bf16.msra.mxu0 0
    %169 = vmatprep.mubr.bf16.mxu0 0
    %170 = vmatmul.mubr.bf16.gmra.mrb[0].mxu0 %v129
    %v171 = vpop.f32.mrb[0].mxu0
    %v172 = vadd.f32 %v100, %v171
    %v173 = vpop.f32.mrb[0].mxu0
    %v174 = vpop.f32.mrb[0].mxu0
    %v175 = vadd.f32 %v100, %v174
    %v176 = vpop.f32.mrb[0].mxu0
    %177 = vmatprep.mubr.bf16.mxu0 0
    %178 = vmatmul.mubr.bf16.gmra.mrb[0].mxu0 %v132
    %v179 = vpop.f32.mrb[0].mxu0
    %v180 = vadd.f32 %v100, %v179
    %v181 = vpop.f32.mrb[0].mxu0
    %v182 = vpop.f32.mrb[0].mxu0
    %v183 = vadd.f32 %v100, %v182
    %v184 = vpop.f32.mrb[0].mxu0
    %185 = vmatprep.mubr.bf16.mxu0 0
    %186 = vmatmul.mubr.bf16.gmra.mrb[0].mxu0 %v135
    %v187 = vpop.f32.mrb[0].mxu0
    %v188 = vadd.f32 %v100, %v187
    %v189 = vpop.f32.mrb[0].mxu0
    %v190 = vpop.f32.mrb[0].mxu0
    %v191 = vpop.f32.mrb[0].mxu0
    %192 = vdwg.mxu0
    %v193 = vld [vmem:[%s3] sm:$0x1]
    %v194 = vld [vmem:[%s4] sm:$0x1]
    %v195 = vadd.f32 %v172, %v175
    %v196 = vadd.f32 %v195, %v180
    %v197 = vadd.f32 %v196, %v183
    %vm198 = vcmask 1041408
    %v199 = vsel %vm198, %v188, 0.0
    %v200 = vadd.f32 %v197, %v199
    %v201 = vrot.slane %v200, 4
    %v202 = vadd.f32 %v200, %v201
    %v203 = vrot.slane %v202, 2
    %v204 = vadd.f32 %v202, %v203
    %v205 = vrot.slane %v204, 1
    %v206 = vadd.f32 %v204, %v205
    %v207 = vmul.f32 %v172, %v172
    %v208 = vmul.f32 %v175, %v175
    %v209 = vmul.f32 %v180, %v180
    %v210 = vmul.f32 %v183, %v183
    %v211 = vmul.f32 %v188, %v188
    %v212 = vadd.f32 %v207, %v208
    %v213 = vadd.f32 %v212, %v209
    %v214 = vadd.f32 %v213, %v210
    %v215 = vsel %vm198, %v211, 0.0
    %v216 = vadd.f32 %v214, %v215
    %v217 = vrot.slane %v216, 4
    %v218 = vadd.f32 %v216, %v217
    %v219 = vrot.slane %v218, 2
    %v220 = vadd.f32 %v218, %v219
    %v221 = vrot.slane %v220, 1
    %v222 = vadd.f32 %v220, %v221
    %v223 = vmul.f32 %v206, 0.029411765
    %v224 = vmul.f32 %v222, 0.029411765
    %v225 = vmul.f32 %v223, %v223
    %v226 = vsub.f32 %v224, %v225
    %v227 = vmax.f32 %v226, 0.0
    %v228 = vadd.f32 %v227, 0.001
    %v229 = vrsqrt.pop %v228
    %v230 = vmul.f32 %v193, %v229
    %v231 = vmul.f32 %v223, %v230
    %v232 = vsub.f32 %v194, %v231
    %v234 = vlaneseq
    %v235 = vshrl.u32 %v234, 7
    %v236 = vsub.s32 0, %v235
    %v237 = vrot.slane %v230, %v236
    %v239 = vmul.f32 %v172, %v237
    %v240 = vmul.f32 %v175, %v237
    %v241 = vmul.f32 %v180, %v237
    %v242 = vmul.f32 %v183, %v237
    %v243 = vmul.f32 %v188, %v237
    %v245 = vlaneseq
    %v246 = vshrl.u32 %v245, 7
    %v247 = vsub.s32 0, %v246
    %v248 = vrot.slane %v232, %v247
    %v250 = vadd.f32 %v239, %v248
    %v251 = vadd.f32 %v240, %v248
    %v252 = vadd.f32 %v241, %v248
    %v253 = vadd.f32 %v242, %v248
    %v254 = vadd.f32 %v243, %v248
    %v255 = vmax.f32 %v250, 0.0
    %v256 = vmax.f32 %v251, 0.0
    %v257 = vmax.f32 %v252, 0.0
    %v258 = vmax.f32 %v253, 0.0
    %v259 = vmax.f32 %v254, 0.0
    %v260 = vld [vmem:[%s5] sm:$0xf]
    %v261 = vld [vmem:[%s5 + $0x4] sm:$0xf]
    %v262 = vld [vmem:[%s5 + $0x8] sm:$0xf]
    %v263 = vld [vmem:[%s5 + $0xc] sm:$0xf]
    %v264 = vld [vmem:[%s5 + $0x10] sm:$0xf]
    %v265 = vld [vmem:[%s5 + $0x14] sm:$0xf]
    %v266 = vld [vmem:[%s5 + $0x18] sm:$0xf]
    %v267 = vld [vmem:[%s5 + $0x1c] sm:$0xf]
    %v268 = vld [vmem:[%s5 + $0x20] sm:$0xf]
    %v269 = vld [vmem:[%s5 + $0x24] sm:$0xf]
    %v270 = vld [vmem:[%s5 + $0x28] sm:$0xf]
    %v271 = vld [vmem:[%s5 + $0x2c] sm:$0xf]
    %v272 = vld [vmem:[%s5 + $0x30] sm:$0xf]
    %v273 = vld [vmem:[%s5 + $0x34] sm:$0xf]
    %v274 = vld [vmem:[%s5 + $0x38] sm:$0xf]
    %v275 = vld [vmem:[%s5 + $0x3c] sm:$0xf]
    %v276 = vld [vmem:[%s6] sm:$0xf]
    %v277 = vadd.f32 %v255, %v256
    %vm278 = vcmask 1040384
    %v279 = vsel %vm278, %v257, 0.0
    %v280 = vadd.f32 %v277, %v279
    %v281 = vrot.slane %v280, 4
    %v282 = vadd.f32 %v280, %v281
    %v283 = vrot.slane %v282, 2
    %v284 = vadd.f32 %v282, %v283
    %v285 = vrot.slane %v284, 1
    %v286 = vadd.f32 %v284, %v285
    %v287 = vrcp.pop 17.0
    %v288 = vmul.f32 %v286, %v287
    %vm292 = vcmask 1046528
    %v293 = vrot.slane %v257, 1
    %v294 = vrot.slane %v258, 1
    %v295 = vsel %vm292, %v293, %v294
    %v296 = vrot.slane %v259, 1
    %v297 = vsel %vm292, %v294, %v296
    %v301 = vadd.f32 %v295, %v297
    %v302 = vsel %vm278, %v296, 0.0
    %v303 = vadd.f32 %v301, %v302
    %v304 = vrot.slane %v303, 4
    %v305 = vadd.f32 %v303, %v304
    %v306 = vrot.slane %v305, 2
    %v307 = vadd.f32 %v305, %v306
    %v308 = vrot.slane %v307, 1
    %v309 = vadd.f32 %v307, %v308
    %v310 = vmul.f32 %v309, %v287
    %v311 = vsel %vm278, %v288, %v310
    %v312 = vpack.c.bf16 %v311, %v311
    %v329 = vunpack.c.l.b16 %v260
    %v330 = vunpack.c.l.b16 %v261
    %v331 = vunpack.c.l.b16 %v262
    %v332 = vunpack.c.l.b16 %v263
    %v333 = vunpack.c.l.b16 %v264
    %v334 = vunpack.c.l.b16 %v265
    %v335 = vunpack.c.l.b16 %v266
    %v336 = vunpack.c.l.b16 %v267
    %v337 = vunpack.c.l.b16 %v268
    %v338 = vunpack.c.l.b16 %v269
    %v339 = vunpack.c.l.b16 %v270
    %v340 = vunpack.c.l.b16 %v271
    %v341 = vunpack.c.l.b16 %v272
    %v342 = vunpack.c.l.b16 %v273
    %v343 = vunpack.c.l.b16 %v274
    %v344 = vunpack.c.l.b16 %v275
    %v345 = vpack.c.b16 %v330, %v329
    %v346 = vpack.c.b16 %v332, %v331
    %v347 = vpack.c.b16 %v334, %v333
    %v348 = vpack.c.b16 %v336, %v335
    %v349 = vpack.c.b16 %v338, %v337
    %v350 = vpack.c.b16 %v340, %v339
    %v351 = vpack.c.b16 %v342, %v341
    %v352 = vpack.c.b16 %v344, %v343
    %361 = vmatprep.subr.bf16.mxu0 0
    %362 = vmatpush1.bf16.msra.mxu0 %v345
    %363 = vmatprep.subr.bf16.mxu0 0
    %364 = vmatpush1.bf16.msra.mxu0 %v346
    %365 = vmatprep.subr.bf16.mxu0 0
    %366 = vmatpush1.bf16.msra.mxu0 %v347
    %367 = vmatprep.subr.bf16.mxu0 0
    %368 = vmatpush1.bf16.msra.mxu0 %v348
    %369 = vmatprep.subr.bf16.mxu0 0
    %370 = vmatpush1.bf16.msra.mxu0 %v349
    %371 = vmatprep.subr.bf16.mxu0 0
    %372 = vmatpush1.bf16.msra.mxu0 %v350
    %373 = vmatprep.subr.bf16.mxu0 0
    %374 = vmatpush1.bf16.msra.mxu0 %v351
    %375 = vmatprep.subr.bf16.mxu0 0
    %376 = vmatpush1.bf16.msra.mxu0 %v352
    %377 = vmatprep.subr.bf16.mxu0 0
    %378 = vmatpush1.bf16.msra.mxu0 0
    %379 = vmatprep.subr.bf16.mxu0 0
    %380 = vmatpush1.bf16.msra.mxu0 0
    %381 = vmatprep.subr.bf16.mxu0 0
    %382 = vmatpush1.bf16.msra.mxu0 0
    %383 = vmatprep.subr.bf16.mxu0 0
    %384 = vmatpush1.bf16.msra.mxu0 0
    %385 = vmatprep.subr.bf16.mxu0 0
    %386 = vmatpush1.bf16.msra.mxu0 0
    %387 = vmatprep.subr.bf16.mxu0 0
    %388 = vmatpush1.bf16.msra.mxu0 0
    %389 = vmatprep.subr.bf16.mxu0 0
    %390 = vmatpush1.bf16.msra.mxu0 0
    %391 = vmatprep.subr.bf16.mxu0 0
    %392 = vmatpush1.bf16.msra.mxu0 0
    %393 = vmatprep.mubr.bf16.mxu0 0
    %394 = vmatmul.mubr.bf16.gmra.mrb[0].mxu0 %v312
    %v395 = vpop.f32.mrb[0].mxu0
    %v396 = vadd.f32 0.0, %v395
    %v397 = vpop.f32.mrb[0].mxu0
    %v398 = vpop.f32.mrb[0].mxu0
    %v399 = vpop.f32.mrb[0].mxu0
    %400 = vdwg.mxu0
    %v401 = vmax.f32 %v396, 0.0
    %v402 = vpack.c.bf16 %v401, %v401
    %vm403 = vcmask 64512
    %v405 = vsel %vm403, %v402, 0
    %vm407 = vcmask 1043456
    %v409 = vsel %vm407, %v276, 0
    %411 = vmatprep.subr.bf16.mxu0 0
    %412 = vmatpush1.bf16.msra.mxu0 %v409
    %413 = vmatprep.subr.bf16.mxu0 0
    %414 = vmatpush1.bf16.msra.mxu0 0
    %415 = vmatprep.subr.bf16.mxu0 0
    %416 = vmatpush1.bf16.msra.mxu0 0
    %417 = vmatprep.subr.bf16.mxu0 0
    %418 = vmatpush1.bf16.msra.mxu0 0
    %419 = vmatprep.subr.bf16.mxu0 0
    %420 = vmatpush1.bf16.msra.mxu0 0
    %421 = vmatprep.subr.bf16.mxu0 0
    %422 = vmatpush1.bf16.msra.mxu0 0
    %423 = vmatprep.subr.bf16.mxu0 0
    %424 = vmatpush1.bf16.msra.mxu0 0
    %425 = vmatprep.subr.bf16.mxu0 0
    %426 = vmatpush1.bf16.msra.mxu0 0
    %427 = vmatprep.subr.bf16.mxu0 0
    %428 = vmatpush1.bf16.msra.mxu0 0
    %429 = vmatprep.subr.bf16.mxu0 0
    %430 = vmatpush1.bf16.msra.mxu0 0
    %431 = vmatprep.subr.bf16.mxu0 0
    %432 = vmatpush1.bf16.msra.mxu0 0
    %433 = vmatprep.subr.bf16.mxu0 0
    %434 = vmatpush1.bf16.msra.mxu0 0
    %435 = vmatprep.subr.bf16.mxu0 0
    %436 = vmatpush1.bf16.msra.mxu0 0
    %437 = vmatprep.subr.bf16.mxu0 0
    %438 = vmatpush1.bf16.msra.mxu0 0
    %439 = vmatprep.subr.bf16.mxu0 0
    %440 = vmatpush1.bf16.msra.mxu0 0
    %441 = vmatprep.subr.bf16.mxu0 0
    %442 = vmatpush1.bf16.msra.mxu0 0
    %443 = vmatprep.mubr.bf16.mxu0 0
    %444 = vmatmul.mubr.bf16.gmra.mrb[0].mxu0 %v405
    %v445 = vpop.f32.mrb[0].mxu0
    %v446 = vadd.f32 0.0, %v445
    %v447 = vpop.f32.mrb[0].mxu0
    %v448 = vpop.f32.mrb[0].mxu0
    %v449 = vpop.f32.mrb[0].mxu0
    %450 = vdwg.mxu0
    %v451 = vxor.u32 %v446, 2147483648
    %v452 = vmul.f32 %v451, 1.442695
    %v453 = vpow.pop %v452
    %v454 = vadd.f32 %v453, 1.0
    %v455 = vrcp.pop %v454
    %v456 = vmul.f32 1.0, %v455
    %v457 = vlaneseq
    %v458 = vshrl.u32 %v457, 7
    %v459 = vsub.s32 0, %v458
    %v460 = vrot.slane %v456, %v459
    %v461 = vlaneseq
    %v462 = vshrl.u32 %v461, 7
    %v463 = vsub.s32 1, %v462
    %v464 = vrot.slane %v456, %v463
    %v465 = vsel %vm278, %v460, %v464
    %v466 = vmul.f32 %v255, %v460
    %v467 = vmul.f32 %v256, %v460
    %v468 = vmul.f32 %v257, %v465
    %v469 = vmul.f32 %v258, %v464
    %v470 = vmul.f32 %v259, %v464
    %v471 = vld [vmem:[#allocation4] sm:$0xff]
    %v472 = vld [vmem:[#allocation4 + $0x8] sm:$0xff]
    %v473 = vld [vmem:[#allocation4 + $0x10] sm:$0xff]
    %v474 = vld [vmem:[#allocation4 + $0x18] sm:$0xff]
    %v475 = vld [vmem:[#allocation4 + $0x20] sm:$0xff]
    %v476 = vld [vmem:[#allocation4 + $0x28] sm:$0xff]
    %v477 = vld [vmem:[#allocation4 + $0x30] sm:$0xff]
    %v478 = vld [vmem:[#allocation4 + $0x38] sm:$0xff]
    %v479 = vld [vmem:[#allocation4 + $0x40] sm:$0xff]
    %v480 = vld [vmem:[#allocation4 + $0x48] sm:$0xff]
    %v481 = vld [vmem:[#allocation4 + $0x50] sm:$0xff]
    %v482 = vld [vmem:[#allocation4 + $0x58] sm:$0xff]
    %v483 = vld [vmem:[#allocation4 + $0x60] sm:$0xff]
    %v484 = vld [vmem:[#allocation4 + $0x68] sm:$0xff]
    %v485 = vld [vmem:[#allocation4 + $0x70] sm:$0xff]
    %v486 = vld [vmem:[#allocation4 + $0x78] sm:$0xff]
    %v487 = vld [vmem:[#allocation4 + $0x80] sm:$0xff]
    %v488 = vld [vmem:[#allocation4 + $0x88] sm:$0xff]
    %v489 = vld [vmem:[#allocation4 + $0x90] sm:$0xff]
    %v490 = vld [vmem:[#allocation4 + $0x98] sm:$0xff]
    %v491 = vld [vmem:[#allocation4 + $0xa0] sm:$0xff]
    %v492 = vld [vmem:[#allocation4 + $0xa8] sm:$0xff]
    %v493 = vld [vmem:[#allocation4 + $0xb0] sm:$0xff]
    %v494 = vld [vmem:[#allocation4 + $0xb8] sm:$0xff]
    %v495 = vld [vmem:[#allocation4 + $0xc0] sm:$0xff]
    %v496 = vld [vmem:[#allocation4 + $0xc8] sm:$0xff]
    %v497 = vld [vmem:[#allocation4 + $0xd0] sm:$0xff]
    %v498 = vld [vmem:[#allocation4 + $0xd8] sm:$0xff]
    %v499 = vld [vmem:[#allocation4 + $0xe0] sm:$0xff]
    %v500 = vld [vmem:[#allocation4 + $0xe8] sm:$0xff]
    %v501 = vld [vmem:[#allocation4 + $0xf0] sm:$0xff]
    %v502 = vld [vmem:[#allocation4 + $0xf8] sm:$0xff]
    %v503 = vld [vmem:[#allocation4 + $0x100] sm:$0xff]
    %v504 = vld [vmem:[#allocation4 + $0x108] sm:$0xff]
    %v505 = vld [vmem:[#allocation4 + $0x110] sm:$0xff]
    %v506 = vld [vmem:[#allocation4 + $0x118] sm:$0xff]
    %v507 = vld [vmem:[#allocation4 + $0x120] sm:$0xff]
    %v508 = vld [vmem:[#allocation4 + $0x128] sm:$0xff]
    %v509 = vld [vmem:[#allocation4 + $0x130] sm:$0xff]
    %v510 = vld [vmem:[#allocation4 + $0x138] sm:$0xff]
    %v511 = vld [vmem:[#allocation4 + $0x140] sm:$0xff]
    %v512 = vld [vmem:[#allocation4 + $0x148] sm:$0xff]
    %v513 = vld [vmem:[#allocation4 + $0x150] sm:$0xff]
    %v514 = vld [vmem:[#allocation4 + $0x158] sm:$0xff]
    %v515 = vld [vmem:[#allocation4 + $0x160] sm:$0xff]
    %v516 = vld [vmem:[#allocation4 + $0x168] sm:$0xff]
    %v517 = vld [vmem:[#allocation4 + $0x170] sm:$0xff]
    %v518 = vld [vmem:[#allocation4 + $0x178] sm:$0xff]
    %v519 = vld [vmem:[#allocation4 + $0x180] sm:$0xff]
    %v520 = vld [vmem:[#allocation4 + $0x188] sm:$0xff]
    %v521 = vld [vmem:[#allocation4 + $0x190] sm:$0xff]
    %v522 = vld [vmem:[#allocation4 + $0x198] sm:$0xff]
    %v523 = vld [vmem:[#allocation4 + $0x1a0] sm:$0xff]
    %v524 = vld [vmem:[#allocation4 + $0x1a8] sm:$0xff]
    %v525 = vld [vmem:[#allocation4 + $0x1b0] sm:$0xff]
    %v526 = vld [vmem:[#allocation4 + $0x1b8] sm:$0xff]
    %v527 = vld [vmem:[#allocation4 + $0x1c0] sm:$0xff]
    %v528 = vld [vmem:[#allocation4 + $0x1c8] sm:$0xff]
    %v529 = vld [vmem:[#allocation4 + $0x1d0] sm:$0xff]
    %v530 = vld [vmem:[#allocation4 + $0x1d8] sm:$0xff]
    %v531 = vld [vmem:[#allocation4 + $0x1e0] sm:$0xff]
    %v532 = vld [vmem:[#allocation4 + $0x1e8] sm:$0xff]
    %v533 = vld [vmem:[#allocation4 + $0x1f0] sm:$0xff]
    %v534 = vld [vmem:[#allocation4 + $0x1f8] sm:$0xff]
    %v535 = vld [vmem:[#allocation4 + $0x200] sm:$0xff]
    %v536 = vld [vmem:[#allocation4 + $0x208] sm:$0xff]
    %v537 = vld [vmem:[#allocation4 + $0x210] sm:$0xff]
    %v538 = vld [vmem:[#allocation4 + $0x218] sm:$0xff]
    %v539 = vld [vmem:[#allocation4 + $0x220] sm:$0xff]
    %v540 = vld [vmem:[#allocation4 + $0x228] sm:$0xff]
    %v541 = vld [vmem:[#allocation4 + $0x230] sm:$0xff]
    %v542 = vld [vmem:[#allocation4 + $0x238] sm:$0xff]
    %v543 = vld [vmem:[#allocation4 + $0x240] sm:$0xff]
    %v544 = vld [vmem:[#allocation4 + $0x248] sm:$0xff]
    %v545 = vld [vmem:[#allocation4 + $0x250] sm:$0xff]
    %v546 = vld [vmem:[#allocation4 + $0x258] sm:$0xff]
    %v547 = vld [vmem:[#allocation4 + $0x260] sm:$0xff]
    %v548 = vld [vmem:[#allocation4 + $0x268] sm:$0xff]
    %v549 = vld [vmem:[#allocation4 + $0x270] sm:$0xff]
    %v550 = vld [vmem:[#allocation4 + $0x278] sm:$0xff]
    %v551 = vld [vmem:[%s8] sm:$0x3]
    %v552 = vlaneseq
    %v553 = vshrl.u32 %v552, 7
    %v554 = vsub.s32 0, %v553
    %v555 = vrot.slane %v466, %v554
    %556 = vst [vmem:[#allocation2 + $0x6] sm:$0x3] %v555
    %557 = vst [vmem:[#allocation2 + $0x8] sm:$0xff] %v466
    %558 = vst [vmem:[#allocation2 + $0x10] sm:$0xff] %v467
    %559 = vst [vmem:[#allocation2 + $0x18] sm:$0x1] %v468
    %v560 = vlaneseq
    %v561 = vshrl.u32 %v560, 7
    %v562 = vsub.s32 0, %v561
    %v563 = vrot.slane %v468, %v562
    %564 = vst [vmem:[#allocation2 + $0x19] sm:$0x3] %v563
    %v565 = vlaneseq
    %v566 = vshrl.u32 %v565, 7
    %v567 = vsub.s32 1, %v566
    %v568 = vrot.slane %v468, %v567
    %s569 = scalar_lea.vmem [#allocation2], 32
    %570 = vst [vmem:[%s569 + $0x6] sm:$0x3] %v568
    %571 = vst [vmem:[%s569 + $0x7] sm:$0xfe] %v468
    %572 = vst [vmem:[%s569 + $0xf] sm:$0xff] %v469
    %573 = vst [vmem:[%s569 + $0x17] sm:$0x3] %v470
    %v574 = vlaneseq
    %v575 = vshrl.u32 %v574, 7
    %v576 = vsub.s32 1, %v575
    %v577 = vrot.slane %v470, %v576
    %578 = vst [vmem:[%s569 + $0x19] sm:$0x3] %v577
    %v579 = vld [vmem:[#allocation2 + $0x6] sm:$0xff]
    %v580 = vld [vmem:[#allocation2 + $0xe] sm:$0xff]
    %v581 = vld [vmem:[#allocation2 + $0x16] sm:$0x1]
    %v582 = vld [vmem:[#allocation2 + $0x7] sm:$0xff]
    %v583 = vld [vmem:[#allocation2 + $0xf] sm:$0xff]
    %v584 = vld [vmem:[#allocation2 + $0x17] sm:$0x1]
    %v585 = vld [vmem:[#allocation2 + $0x8] sm:$0xff]
    %v586 = vld [vmem:[#allocation2 + $0x10] sm:$0xff]
    %v587 = vld [vmem:[#allocation2 + $0x18] sm:$0x1]
    %v588 = vld [vmem:[#allocation2 + $0x9] sm:$0xff]
    %v589 = vld [vmem:[#allocation2 + $0x11] sm:$0xff]
    %v590 = vld [vmem:[#allocation2 + $0x19] sm:$0x1]
    %v591 = vld [vmem:[#allocation2 + $0xa] sm:$0xff]
    %v592 = vld [vmem:[#allocation2 + $0x12] sm:$0xff]
    %v593 = vld [vmem:[#allocation2 + $0x1a] sm:$0x1]
    %v594 = vld [vmem:[%s569 + $0x6] sm:$0xff]
    %v595 = vld [vmem:[%s569 + $0xe] sm:$0xff]
    %v596 = vld [vmem:[%s569 + $0x16] sm:$0x1]
    %v597 = vld [vmem:[%s569 + $0x7] sm:$0xff]
    %v598 = vld [vmem:[%s569 + $0xf] sm:$0xff]
    %v599 = vld [vmem:[%s569 + $0x17] sm:$0x1]
    %v600 = vld [vmem:[%s569 + $0x8] sm:$0xff]
    %v601 = vld [vmem:[%s569 + $0x10] sm:$0xff]
    %v602 = vld [vmem:[%s569 + $0x18] sm:$0x1]
    %v603 = vld [vmem:[%s569 + $0x9] sm:$0xff]
    %v604 = vld [vmem:[%s569 + $0x11] sm:$0xff]
    %v605 = vld [vmem:[%s569 + $0x19] sm:$0x1]
    %v606 = vld [vmem:[%s569 + $0xa] sm:$0xff]
    %v607 = vld [vmem:[%s569 + $0x12] sm:$0xff]
    %v608 = vld [vmem:[%s569 + $0x1a] sm:$0x1]
    %v624 = vrot.slane %v594, 7
    %v625 = vrot.slane %v597, 7
    %v626 = vrot.slane %v600, 7
    %v627 = vrot.slane %v603, 7
    %v628 = vrot.slane %v606, 7
    %v629 = vrot.slane %v595, 7
    %v630 = vsel %vm278, %v624, %v629
    %v631 = vrot.slane %v598, 7
    %v632 = vsel %vm278, %v625, %v631
    %v633 = vrot.slane %v601, 7
    %v634 = vsel %vm278, %v626, %v633
    %v635 = vrot.slane %v604, 7
    %v636 = vsel %vm278, %v627, %v635
    %v637 = vrot.slane %v607, 7
    %v638 = vsel %vm278, %v628, %v637
    %v639 = vrot.slane %v596, 7
    %v640 = vsel %vm278, %v629, %v639
    %v641 = vrot.slane %v599, 7
    %v642 = vsel %vm278, %v631, %v641
    %v643 = vrot.slane %v602, 7
    %v644 = vsel %vm278, %v633, %v643
    %v645 = vrot.slane %v605, 7
    %v646 = vsel %vm278, %v635, %v645
    %v647 = vrot.slane %v608, 7
    %v648 = vsel %vm278, %v637, %v647
    %v664 = vsel %vm278, %v581, %v624
    %v665 = vsel %vm278, %v584, %v625
    %v666 = vsel %vm278, %v587, %v626
    %v667 = vsel %vm278, %v590, %v627
    %v668 = vsel %vm278, %v593, %v628
    %v669 = vpack.c.bf16 %v580, %v579
    %v670 = vpack.c.bf16 %v583, %v582
    %v671 = vpack.c.bf16 %v586, %v585
    %v672 = vpack.c.bf16 %v589, %v588
    %v673 = vpack.c.bf16 %v592, %v591
    %v674 = vpack.c.bf16 %v630, %v664
    %v675 = vpack.c.bf16 %v632, %v665
    %v676 = vpack.c.bf16 %v634, %v666
    %v677 = vpack.c.bf16 %v636, %v667
    %v678 = vpack.c.bf16 %v638, %v668
    %v679 = vpack.c.bf16 %v640, %v640
    %v680 = vpack.c.bf16 %v642, %v642
    %v681 = vpack.c.bf16 %v644, %v644
    %v682 = vpack.c.bf16 %v646, %v646
    %v683 = vpack.c.bf16 %v648, %v648
    %v685 = vlaneseq
    %v686 = vshrl.u32 %v685, 7
    %v687 = vsub.s32 0, %v686
    %v688 = vrot.slane %v551, %v687
    %v689 = vlaneseq
    %v690 = vshrl.u32 %v689, 7
    %v691 = vsub.s32 1, %v690
    %v692 = vrot.slane %v551, %v691
    %v775 = vunpack.c.l.b16 %v471
    %v776 = vunpack.c.h.b16 %v471
    %v777 = vunpack.c.l.b16 %v472
    %v778 = vunpack.c.h.b16 %v472
    %v779 = vunpack.c.l.b16 %v473
    %v780 = vunpack.c.h.b16 %v473
    %v781 = vunpack.c.l.b16 %v474
    %v782 = vunpack.c.h.b16 %v474
    %v783 = vunpack.c.l.b16 %v475
    %v784 = vunpack.c.h.b16 %v475
    %v785 = vunpack.c.l.b16 %v476
    %v786 = vunpack.c.h.b16 %v476
    %v787 = vunpack.c.l.b16 %v477
    %v788 = vunpack.c.h.b16 %v477
    %v789 = vunpack.c.l.b16 %v478
    %v790 = vunpack.c.h.b16 %v478
    %v791 = vunpack.c.l.b16 %v479
    %v792 = vunpack.c.h.b16 %v479
    %v793 = vunpack.c.l.b16 %v480
    %v794 = vunpack.c.h.b16 %v480
    %v795 = vunpack.c.l.b16 %v481
    %v796 = vunpack.c.h.b16 %v481
    %v797 = vunpack.c.l.b16 %v482
    %v798 = vunpack.c.h.b16 %v482
    %v799 = vunpack.c.l.b16 %v483
    %v800 = vunpack.c.h.b16 %v483
    %v801 = vunpack.c.l.b16 %v484
    %v802 = vunpack.c.h.b16 %v484
    %v803 = vunpack.c.l.b16 %v485
    %v804 = vunpack.c.h.b16 %v485
    %v805 = vunpack.c.l.b16 %v486
    %v806 = vunpack.c.h.b16 %v486
    %v807 = vunpack.c.l.b16 %v487
    %v808 = vunpack.c.h.b16 %v487
    %v809 = vunpack.c.l.b16 %v488
    %v810 = vunpack.c.h.b16 %v488
    %v811 = vunpack.c.l.b16 %v489
    %v812 = vunpack.c.h.b16 %v489
    %v813 = vunpack.c.l.b16 %v490
    %v814 = vunpack.c.h.b16 %v490
    %v815 = vunpack.c.l.b16 %v491
    %v816 = vunpack.c.h.b16 %v491
    %v817 = vunpack.c.l.b16 %v492
    %v818 = vunpack.c.h.b16 %v492
    %v819 = vunpack.c.l.b16 %v493
    %v820 = vunpack.c.h.b16 %v493
    %v821 = vunpack.c.l.b16 %v494
    %v822 = vunpack.c.h.b16 %v494
    %v823 = vunpack.c.l.b16 %v495
    %v824 = vunpack.c.h.b16 %v495
    %v825 = vunpack.c.l.b16 %v496
    %v826 = vunpack.c.h.b16 %v496
    %v827 = vunpack.c.l.b16 %v497
    %v828 = vunpack.c.h.b16 %v497
    %v829 = vunpack.c.l.b16 %v498
    %v830 = vunpack.c.h.b16 %v498
    %v831 = vunpack.c.l.b16 %v499
    %v832 = vunpack.c.h.b16 %v499
    %v833 = vunpack.c.l.b16 %v500
    %v834 = vunpack.c.h.b16 %v500
    %v835 = vunpack.c.l.b16 %v501
    %v836 = vunpack.c.h.b16 %v501
    %v837 = vunpack.c.l.b16 %v502
    %v838 = vunpack.c.h.b16 %v502
    %v839 = vunpack.c.l.b16 %v503
    %v840 = vunpack.c.h.b16 %v503
    %v841 = vunpack.c.l.b16 %v504
    %v842 = vunpack.c.h.b16 %v504
    %v843 = vunpack.c.l.b16 %v505
    %v844 = vunpack.c.h.b16 %v505
    %v845 = vunpack.c.l.b16 %v506
    %v846 = vunpack.c.h.b16 %v506
    %v847 = vunpack.c.l.b16 %v507
    %v848 = vunpack.c.h.b16 %v507
    %v849 = vunpack.c.l.b16 %v508
    %v850 = vunpack.c.h.b16 %v508
    %v851 = vunpack.c.l.b16 %v509
    %v852 = vunpack.c.h.b16 %v509
    %v853 = vunpack.c.l.b16 %v510
    %v854 = vunpack.c.h.b16 %v510
    %v855 = vunpack.c.l.b16 %v511
    %v856 = vunpack.c.h.b16 %v511
    %v857 = vunpack.c.l.b16 %v512
    %v858 = vunpack.c.h.b16 %v512
    %v859 = vunpack.c.l.b16 %v513
    %v860 = vunpack.c.h.b16 %v513
    %v861 = vunpack.c.l.b16 %v514
    %v862 = vunpack.c.h.b16 %v514
    %v863 = vunpack.c.l.b16 %v515
    %v864 = vunpack.c.h.b16 %v515
    %v865 = vunpack.c.l.b16 %v516
    %v866 = vunpack.c.h.b16 %v516
    %v867 = vunpack.c.l.b16 %v517
    %v868 = vunpack.c.h.b16 %v517
    %v869 = vunpack.c.l.b16 %v518
    %v870 = vunpack.c.h.b16 %v518
    %v871 = vunpack.c.l.b16 %v519
    %v872 = vunpack.c.h.b16 %v519
    %v873 = vunpack.c.l.b16 %v520
    %v874 = vunpack.c.h.b16 %v520
    %v875 = vunpack.c.l.b16 %v521
    %v876 = vunpack.c.h.b16 %v521
    %v877 = vunpack.c.l.b16 %v522
    %v878 = vunpack.c.h.b16 %v522
    %v879 = vunpack.c.l.b16 %v523
    %v880 = vunpack.c.h.b16 %v523
    %v881 = vunpack.c.l.b16 %v524
    %v882 = vunpack.c.h.b16 %v524
    %v883 = vunpack.c.l.b16 %v525
    %v884 = vunpack.c.h.b16 %v525
    %v885 = vunpack.c.l.b16 %v526
    %v886 = vunpack.c.h.b16 %v526
    %v887 = vunpack.c.l.b16 %v527
    %v888 = vunpack.c.h.b16 %v527
    %v889 = vunpack.c.l.b16 %v528
    %v890 = vunpack.c.h.b16 %v528
    %v891 = vunpack.c.l.b16 %v529
    %v892 = vunpack.c.h.b16 %v529
    %v893 = vunpack.c.l.b16 %v530
    %v894 = vunpack.c.h.b16 %v530
    %v895 = vunpack.c.l.b16 %v531
    %v896 = vunpack.c.h.b16 %v531
    %v897 = vunpack.c.l.b16 %v532
    %v898 = vunpack.c.h.b16 %v532
    %v899 = vunpack.c.l.b16 %v533
    %v900 = vunpack.c.h.b16 %v533
    %v901 = vunpack.c.l.b16 %v534
    %v902 = vunpack.c.h.b16 %v534
    %v903 = vunpack.c.l.b16 %v535
    %v904 = vunpack.c.h.b16 %v535
    %v905 = vunpack.c.l.b16 %v536
    %v906 = vunpack.c.h.b16 %v536
    %v907 = vunpack.c.l.b16 %v537
    %v908 = vunpack.c.h.b16 %v537
    %v909 = vunpack.c.l.b16 %v538
    %v910 = vunpack.c.h.b16 %v538
    %v911 = vunpack.c.l.b16 %v539
    %v912 = vunpack.c.h.b16 %v539
    %v913 = vunpack.c.l.b16 %v540
    %v914 = vunpack.c.h.b16 %v540
    %v915 = vunpack.c.l.b16 %v541
    %v916 = vunpack.c.h.b16 %v541
    %v917 = vunpack.c.l.b16 %v542
    %v918 = vunpack.c.h.b16 %v542
    %v919 = vunpack.c.l.b16 %v543
    %v920 = vunpack.c.h.b16 %v543
    %v921 = vunpack.c.l.b16 %v544
    %v922 = vunpack.c.h.b16 %v544
    %v923 = vunpack.c.l.b16 %v545
    %v924 = vunpack.c.h.b16 %v545
    %v925 = vunpack.c.l.b16 %v546
    %v926 = vunpack.c.h.b16 %v546
    %v927 = vunpack.c.l.b16 %v547
    %v928 = vunpack.c.h.b16 %v547
    %v929 = vunpack.c.l.b16 %v548
    %v930 = vunpack.c.h.b16 %v548
    %v931 = vunpack.c.l.b16 %v549
    %v932 = vunpack.c.h.b16 %v549
    %v933 = vunpack.c.l.b16 %v550
    %v934 = vunpack.c.h.b16 %v550
    %v935 = vpack.c.b16 %v777, %v775
    %v936 = vpack.c.b16 %v778, %v776
    %v937 = vpack.c.b16 %v781, %v779
    %v938 = vpack.c.b16 %v782, %v780
    %v939 = vpack.c.b16 %v785, %v783
    %v940 = vpack.c.b16 %v786, %v784
    %v941 = vpack.c.b16 %v789, %v787
    %v942 = vpack.c.b16 %v790, %v788
    %v943 = vpack.c.b16 %v793, %v791
    %v944 = vpack.c.b16 %v794, %v792
    %v945 = vpack.c.b16 %v797, %v795
    %v946 = vpack.c.b16 %v798, %v796
    %v947 = vpack.c.b16 %v801, %v799
    %v948 = vpack.c.b16 %v802, %v800
    %v949 = vpack.c.b16 %v805, %v803
    %v950 = vpack.c.b16 %v806, %v804
    %v951 = vpack.c.b16 %v809, %v807
    %v952 = vpack.c.b16 %v810, %v808
    %v953 = vpack.c.b16 %v813, %v811
    %v954 = vpack.c.b16 %v814, %v812
    %v955 = vpack.c.b16 %v817, %v815
    %v956 = vpack.c.b16 %v818, %v816
    %v957 = vpack.c.b16 %v821, %v819
    %v958 = vpack.c.b16 %v822, %v820
    %v959 = vpack.c.b16 %v825, %v823
    %v960 = vpack.c.b16 %v826, %v824
    %v961 = vpack.c.b16 %v829, %v827
    %v962 = vpack.c.b16 %v830, %v828
    %v963 = vpack.c.b16 %v833, %v831
    %v964 = vpack.c.b16 %v834, %v832
    %v965 = vpack.c.b16 %v837, %v835
    %v966 = vpack.c.b16 %v838, %v836
    %v967 = vpack.c.b16 %v841, %v839
    %v968 = vpack.c.b16 %v842, %v840
    %v969 = vpack.c.b16 %v845, %v843
    %v970 = vpack.c.b16 %v846, %v844
    %v971 = vpack.c.b16 %v849, %v847
    %v972 = vpack.c.b16 %v850, %v848
    %v973 = vpack.c.b16 %v853, %v851
    %v974 = vpack.c.b16 %v854, %v852
    %v975 = vpack.c.b16 %v857, %v855
    %v976 = vpack.c.b16 %v858, %v856
    %v977 = vpack.c.b16 %v861, %v859
    %v978 = vpack.c.b16 %v862, %v860
    %v979 = vpack.c.b16 %v865, %v863
    %v980 = vpack.c.b16 %v866, %v864
    %v981 = vpack.c.b16 %v869, %v867
    %v982 = vpack.c.b16 %v870, %v868
    %v983 = vpack.c.b16 %v873, %v871
    %v984 = vpack.c.b16 %v874, %v872
    %v985 = vpack.c.b16 %v877, %v875
    %v986 = vpack.c.b16 %v878, %v876
    %v987 = vpack.c.b16 %v881, %v879
    %v988 = vpack.c.b16 %v882, %v880
    %v989 = vpack.c.b16 %v885, %v883
    %v990 = vpack.c.b16 %v886, %v884
    %v991 = vpack.c.b16 %v889, %v887
    %v992 = vpack.c.b16 %v890, %v888
    %v993 = vpack.c.b16 %v893, %v891
    %v994 = vpack.c.b16 %v894, %v892
    %v995 = vpack.c.b16 %v897, %v895
    %v996 = vpack.c.b16 %v898, %v896
    %v997 = vpack.c.b16 %v901, %v899
    %v998 = vpack.c.b16 %v902, %v900
    %v999 = vpack.c.b16 %v905, %v903
    %v1000 = vpack.c.b16 %v906, %v904
    %v1001 = vpack.c.b16 %v909, %v907
    %v1002 = vpack.c.b16 %v910, %v908
    %v1003 = vpack.c.b16 %v913, %v911
    %v1004 = vpack.c.b16 %v914, %v912
    %v1005 = vpack.c.b16 %v917, %v915
    %v1006 = vpack.c.b16 %v918, %v916
    %v1007 = vpack.c.b16 %v921, %v919
    %v1008 = vpack.c.b16 %v922, %v920
    %v1009 = vpack.c.b16 %v925, %v923
    %v1010 = vpack.c.b16 %v926, %v924
    %v1011 = vpack.c.b16 %v929, %v927
    %v1012 = vpack.c.b16 %v930, %v928
    %v1013 = vpack.c.b16 %v933, %v931
    %v1014 = vpack.c.b16 %v934, %v932
    %1095 = vmatprep.subr.bf16.mxu0 %v936
    %1096 = vmatpush1.bf16.msra.mxu0 %v935
    %1097 = vmatprep.subr.bf16.mxu0 %v938
    %1098 = vmatpush1.bf16.msra.mxu0 %v937
    %1099 = vmatprep.subr.bf16.mxu0 %v940
    %1100 = vmatpush1.bf16.msra.mxu0 %v939
    %1101 = vmatprep.subr.bf16.mxu0 %v942
    %1102 = vmatpush1.bf16.msra.mxu0 %v941
    %1103 = vmatprep.subr.bf16.mxu0 %v944
    %1104 = vmatpush1.bf16.msra.mxu0 %v943
    %1105 = vmatprep.subr.bf16.mxu0 %v946
    %1106 = vmatpush1.bf16.msra.mxu0 %v945
    %1107 = vmatprep.subr.bf16.mxu0 %v948
    %1108 = vmatpush1.bf16.msra.mxu0 %v947
    %1109 = vmatprep.subr.bf16.mxu0 %v950
    %1110 = vmatpush1.bf16.msra.mxu0 %v949
    %1111 = vmatprep.subr.bf16.mxu0 %v952
    %1112 = vmatpush1.bf16.msra.mxu0 %v951
    %1113 = vmatprep.subr.bf16.mxu0 %v954
    %1114 = vmatpush1.bf16.msra.mxu0 %v953
    %1115 = vmatprep.subr.bf16.mxu0 %v956
    %1116 = vmatpush1.bf16.msra.mxu0 %v955
    %1117 = vmatprep.subr.bf16.mxu0 %v958
    %1118 = vmatpush1.bf16.msra.mxu0 %v957
    %1119 = vmatprep.subr.bf16.mxu0 %v960
    %1120 = vmatpush1.bf16.msra.mxu0 %v959
    %1121 = vmatprep.subr.bf16.mxu0 %v962
    %1122 = vmatpush1.bf16.msra.mxu0 %v961
    %1123 = vmatprep.subr.bf16.mxu0 %v964
    %1124 = vmatpush1.bf16.msra.mxu0 %v963
    %1125 = vmatprep.subr.bf16.mxu0 %v966
    %1126 = vmatpush1.bf16.msra.mxu0 %v965
    %1127 = vmatprep.mubr.bf16.mxu0 %v670
    %1128 = vmatmul.mubr.bf16.gmra.mrb[0].mxu0 %v669
    %v1129 = vpop.f32.mrb[0].mxu0
    %v1130 = vadd.f32 %v688, %v1129
    %v1131 = vpop.f32.mrb[0].mxu0
    %v1132 = vadd.f32 %v692, %v1131
    %v1133 = vpop.f32.mrb[0].mxu0
    %v1134 = vadd.f32 %v688, %v1133
    %v1135 = vpop.f32.mrb[0].mxu0
    %v1136 = vadd.f32 %v692, %v1135
    %1137 = vmatprep.mubr.bf16.mxu0 %v675
    %1138 = vmatmul.mubr.bf16.gmra.mrb[0].mxu0 %v674
    %v1139 = vpop.f32.mrb[0].mxu0
    %v1140 = vadd.f32 %v688, %v1139
    %v1141 = vpop.f32.mrb[0].mxu0
    %v1142 = vadd.f32 %v692, %v1141
    %v1143 = vpop.f32.mrb[0].mxu0
    %v1144 = vadd.f32 %v688, %v1143
    %v1145 = vpop.f32.mrb[0].mxu0
    %v1146 = vadd.f32 %v692, %v1145
    %1147 = vmatprep.mubr.bf16.mxu0 %v680
    %1148 = vmatmul.mubr.bf16.gmra.mrb[0].mxu0 %v679
    %v1149 = vpop.f32.mrb[0].mxu0
    %v1150 = vadd.f32 %v688, %v1149
    %v1151 = vpop.f32.mrb[0].mxu0
    %v1152 = vadd.f32 %v692, %v1151
    %v1153 = vpop.f32.mrb[0].mxu0
    %v1154 = vpop.f32.mrb[0].mxu0
    %1155 = vdwg.mxu0
    %1156 = vmatprep.subr.bf16.mxu0 %v968
    %1157 = vmatpush1.bf16.msra.mxu0 %v967
    %1158 = vmatprep.subr.bf16.mxu0 %v970
    %1159 = vmatpush1.bf16.msra.mxu0 %v969
    %1160 = vmatprep.subr.bf16.mxu0 %v972
    %1161 = vmatpush1.bf16.msra.mxu0 %v971
    %1162 = vmatprep.subr.bf16.mxu0 %v974
    %1163 = vmatpush1.bf16.msra.mxu0 %v973
    %1164 = vmatprep.subr.bf16.mxu0 %v976
    %1165 = vmatpush1.bf16.msra.mxu0 %v975
    %1166 = vmatprep.subr.bf16.mxu0 %v978
    %1167 = vmatpush1.bf16.msra.mxu0 %v977
    %1168 = vmatprep.subr.bf16.mxu0 %v980
    %1169 = vmatpush1.bf16.msra.mxu0 %v979
    %1170 = vmatprep.subr.bf16.mxu0 %v982
    %1171 = vmatpush1.bf16.msra.mxu0 %v981
    %1172 = vmatprep.subr.bf16.mxu0 %v984
    %1173 = vmatpush1.bf16.msra.mxu0 %v983
    %1174 = vmatprep.subr.bf16.mxu0 %v986
    %1175 = vmatpush1.bf16.msra.mxu0 %v985
    %1176 = vmatprep.subr.bf16.mxu0 %v988
    %1177 = vmatpush1.bf16.msra.mxu0 %v987
    %1178 = vmatprep.subr.bf16.mxu0 %v990
    %1179 = vmatpush1.bf16.msra.mxu0 %v989
    %1180 = vmatprep.subr.bf16.mxu0 %v992
    %1181 = vmatpush1.bf16.msra.mxu0 %v991
    %1182 = vmatprep.subr.bf16.mxu0 %v994
    %1183 = vmatpush1.bf16.msra.mxu0 %v993
    %1184 = vmatprep.subr.bf16.mxu0 %v996
    %1185 = vmatpush1.bf16.msra.mxu0 %v995
    %1186 = vmatprep.subr.bf16.mxu0 %v998
    %1187 = vmatpush1.bf16.msra.mxu0 %v997
    %1188 = vmatprep.mubr.bf16.mxu0 %v672
    %1189 = vmatmul.mubr.bf16.gmra.mrb[0].mxu0 %v671
    %v1190 = vpop.f32.mrb[0].mxu0
    %v1191 = vadd.f32 %v1130, %v1190
    %v1192 = vpop.f32.mrb[0].mxu0
    %v1193 = vadd.f32 %v1132, %v1192
    %v1194 = vpop.f32.mrb[0].mxu0
    %v1195 = vadd.f32 %v1134, %v1194
    %v1196 = vpop.f32.mrb[0].mxu0
    %v1197 = vadd.f32 %v1136, %v1196
    %1198 = vmatprep.mubr.bf16.mxu0 %v677
    %1199 = vmatmul.mubr.bf16.gmra.mrb[0].mxu0 %v676
    %v1200 = vpop.f32.mrb[0].mxu0
    %v1201 = vadd.f32 %v1140, %v1200
    %v1202 = vpop.f32.mrb[0].mxu0
    %v1203 = vadd.f32 %v1142, %v1202
    %v1204 = vpop.f32.mrb[0].mxu0
    %v1205 = vadd.f32 %v1144, %v1204
    %v1206 = vpop.f32.mrb[0].mxu0
    %v1207 = vadd.f32 %v1146, %v1206
    %1208 = vmatprep.mubr.bf16.mxu0 %v682
    %1209 = vmatmul.mubr.bf16.gmra.mrb[0].mxu0 %v681
    %v1210 = vpop.f32.mrb[0].mxu0
    %v1211 = vadd.f32 %v1150, %v1210
    %v1212 = vpop.f32.mrb[0].mxu0
    %v1213 = vadd.f32 %v1152, %v1212
    %v1214 = vpop.f32.mrb[0].mxu0
    %v1215 = vpop.f32.mrb[0].mxu0
    %1216 = vdwg.mxu0
    %1217 = vmatprep.subr.bf16.mxu0 %v1000
    %1218 = vmatpush1.bf16.msra.mxu0 %v999
    %1219 = vmatprep.subr.bf16.mxu0 %v1002
    %1220 = vmatpush1.bf16.msra.mxu0 %v1001
    %1221 = vmatprep.subr.bf16.mxu0 %v1004
    %1222 = vmatpush1.bf16.msra.mxu0 %v1003
    %1223 = vmatprep.subr.bf16.mxu0 %v1006
    %1224 = vmatpush1.bf16.msra.mxu0 %v1005
    %1225 = vmatprep.subr.bf16.mxu0 %v1008
    %1226 = vmatpush1.bf16.msra.mxu0 %v1007
    %1227 = vmatprep.subr.bf16.mxu0 %v1010
    %1228 = vmatpush1.bf16.msra.mxu0 %v1009
    %1229 = vmatprep.subr.bf16.mxu0 %v1012
    %1230 = vmatpush1.bf16.msra.mxu0 %v1011
    %1231 = vmatprep.subr.bf16.mxu0 %v1014
    %1232 = vmatpush1.bf16.msra.mxu0 %v1013
    %1233 = vmatprep.subr.bf16.mxu0 0
    %1234 = vmatpush1.bf16.msra.mxu0 0
    %1235 = vmatprep.subr.bf16.mxu0 0
    %1236 = vmatpush1.bf16.msra.mxu0 0
    %1237 = vmatprep.subr.bf16.mxu0 0
    %1238 = vmatpush1.bf16.msra.mxu0 0
    %1239 = vmatprep.subr.bf16.mxu0 0
    %1240 = vmatpush1.bf16.msra.mxu0 0
    %1241 = vmatprep.subr.bf16.mxu0 0
    %1242 = vmatpush1.bf16.msra.mxu0 0
    %1243 = vmatprep.subr.bf16.mxu0 0
    %1244 = vmatpush1.bf16.msra.mxu0 0
    %1245 = vmatprep.subr.bf16.mxu0 0
    %1246 = vmatpush1.bf16.msra.mxu0 0
    %1247 = vmatprep.subr.bf16.mxu0 0
    %1248 = vmatpush1.bf16.msra.mxu0 0
    %1249 = vmatprep.mubr.bf16.mxu0 0
    %1250 = vmatmul.mubr.bf16.gmra.mrb[0].mxu0 %v673
    %v1251 = vpop.f32.mrb[0].mxu0
    %v1252 = vadd.f32 %v1191, %v1251
    %v1253 = vpop.f32.mrb[0].mxu0
    %v1254 = vadd.f32 %v1193, %v1253
    %v1255 = vpop.f32.mrb[0].mxu0
    %v1256 = vadd.f32 %v1195, %v1255
    %v1257 = vpop.f32.mrb[0].mxu0
    %v1258 = vadd.f32 %v1197, %v1257
    %1259 = vmatprep.mubr.bf16.mxu0 0
    %1260 = vmatmul.mubr.bf16.gmra.mrb[0].mxu0 %v678
    %v1261 = vpop.f32.mrb[0].mxu0
    %v1262 = vadd.f32 %v1201, %v1261
    %v1263 = vpop.f32.mrb[0].mxu0
    %v1264 = vadd.f32 %v1203, %v1263
    %v1265 = vpop.f32.mrb[0].mxu0
    %v1266 = vadd.f32 %v1205, %v1265
    %v1267 = vpop.f32.mrb[0].mxu0
    %v1268 = vadd.f32 %v1207, %v1267
    %1269 = vmatprep.mubr.bf16.mxu0 0
    %1270 = vmatmul.mubr.bf16.gmra.mrb[0].mxu0 %v683
    %v1271 = vpop.f32.mrb[0].mxu0
    %v1272 = vadd.f32 %v1211, %v1271
    %v1273 = vpop.f32.mrb[0].mxu0
    %v1274 = vadd.f32 %v1213, %v1273
    %v1275 = vpop.f32.mrb[0].mxu0
    %v1276 = vpop.f32.mrb[0].mxu0
    %1277 = vdwg.mxu0
    %v1278 = vld [vmem:[%s9] sm:$0x3]
    %v1279 = vld [vmem:[%s10] sm:$0x3]
    %v1280 = vadd.f32 %v1252, %v1256
    %v1281 = vadd.f32 %v1280, %v1262
    %v1282 = vadd.f32 %v1281, %v1266
    %v1283 = vsel %vm198, %v1272, 0.0
    %v1284 = vadd.f32 %v1282, %v1283
    %v1285 = vrot.slane %v1284, 4
    %v1286 = vadd.f32 %v1284, %v1285
    %v1287 = vrot.slane %v1286, 2
    %v1288 = vadd.f32 %v1286, %v1287
    %v1289 = vrot.slane %v1288, 1
    %v1290 = vadd.f32 %v1288, %v1289
    %v1291 = vadd.f32 %v1254, %v1258
    %v1292 = vadd.f32 %v1291, %v1264
    %v1293 = vadd.f32 %v1292, %v1268
    %v1294 = vsel %vm198, %v1274, 0.0
    %v1295 = vadd.f32 %v1293, %v1294
    %v1296 = vrot.slane %v1295, 4
    %v1297 = vadd.f32 %v1295, %v1296
    %v1298 = vrot.slane %v1297, 2
    %v1299 = vadd.f32 %v1297, %v1298
    %v1300 = vrot.slane %v1299, 1
    %v1301 = vadd.f32 %v1299, %v1300
    %v1302 = vmul.f32 %v1252, %v1252
    %v1303 = vmul.f32 %v1254, %v1254
    %v1304 = vmul.f32 %v1256, %v1256
    %v1305 = vmul.f32 %v1258, %v1258
    %v1306 = vmul.f32 %v1262, %v1262
    %v1307 = vmul.f32 %v1264, %v1264
    %v1308 = vmul.f32 %v1266, %v1266
    %v1309 = vmul.f32 %v1268, %v1268
    %v1310 = vmul.f32 %v1272, %v1272
    %v1311 = vmul.f32 %v1274, %v1274
    %v1312 = vadd.f32 %v1302, %v1304
    %v1313 = vadd.f32 %v1312, %v1306
    %v1314 = vadd.f32 %v1313, %v1308
    %v1315 = vsel %vm198, %v1310, 0.0
    %v1316 = vadd.f32 %v1314, %v1315
    %v1317 = vrot.slane %v1316, 4
    %v1318 = vadd.f32 %v1316, %v1317
    %v1319 = vrot.slane %v1318, 2
    %v1320 = vadd.f32 %v1318, %v1319
    %v1321 = vrot.slane %v1320, 1
    %v1322 = vadd.f32 %v1320, %v1321
    %v1323 = vadd.f32 %v1303, %v1305
    %v1324 = vadd.f32 %v1323, %v1307
    %v1325 = vadd.f32 %v1324, %v1309
    %v1326 = vsel %vm198, %v1311, 0.0
    %v1327 = vadd.f32 %v1325, %v1326
    %v1328 = vrot.slane %v1327, 4
    %v1329 = vadd.f32 %v1327, %v1328
    %v1330 = vrot.slane %v1329, 2
    %v1331 = vadd.f32 %v1329, %v1330
    %v1332 = vrot.slane %v1331, 1
    %v1333 = vadd.f32 %v1331, %v1332
    %v1334 = vmul.f32 %v1290, 0.029411765
    %v1335 = vmul.f32 %v1301, 0.029411765
    %v1336 = vmul.f32 %v1322, 0.029411765
    %v1337 = vmul.f32 %v1333, 0.029411765
    %v1338 = vmul.f32 %v1334, %v1334
    %v1339 = vmul.f32 %v1335, %v1335
    %v1340 = vsub.f32 %v1336, %v1338
    %v1341 = vsub.f32 %v1337, %v1339
    %v1342 = vmax.f32 %v1340, 0.0
    %v1343 = vmax.f32 %v1341, 0.0
    %v1344 = vadd.f32 %v1342, 0.001
    %v1345 = vadd.f32 %v1343, 0.001
    %v1346 = vrsqrt.pop %v1344
    %v1347 = vrsqrt.pop %v1345
    %v1350 = vcombine.low %v1346, %v1347
    %v1352 = vunpack.c.l.s4 1966171168
    %v1353 = vunpack.c.0.s8 %v1352
    %v1354 = vlaneseq
    %v1355 = vshrl.u32 %v1354, 7
    %v1356 = vsub.s32 %v1353, %v1355
    %v1357 = vrot.slane %v1350, %v1356
    %v1359 = vunpack.c.l.s4 1966171168
    %v1360 = vunpack.c.0.s8 %v1359
    %v1361 = vlaneseq
    %v1362 = vshrl.u32 %v1361, 7
    %v1363 = vsub.s32 %v1360, %v1362
    %v1364 = vrot.slane %v1357, %v1363
    %v1366 = vmul.f32 %v1278, %v1364
    %v1368 = vlaneseq
    %v1369 = vshrl.u32 %v1368, 7
    %v1370 = vsub.s32 0, %v1369
    %v1371 = vrot.slane %v1366, %v1370
    %v1372 = vlaneseq
    %v1373 = vshrl.u32 %v1372, 7
    %v1374 = vsub.s32 1, %v1373
    %v1375 = vrot.slane %v1366, %v1374
    %v1378 = vmul.f32 %v1334, %v1371
    %v1379 = vmul.f32 %v1335, %v1375
    %v1382 = vcombine.low %v1378, %v1379
    %v1384 = vunpack.c.l.s4 1966171168
    %v1385 = vunpack.c.0.s8 %v1384
    %v1386 = vlaneseq
    %v1387 = vshrl.u32 %v1386, 7
    %v1388 = vsub.s32 %v1385, %v1387
    %v1389 = vrot.slane %v1382, %v1388
    %v1391 = vunpack.c.l.s4 1966171168
    %v1392 = vunpack.c.0.s8 %v1391
    %v1393 = vlaneseq
    %v1394 = vshrl.u32 %v1393, 7
    %v1395 = vsub.s32 %v1392, %v1394
    %v1396 = vrot.slane %v1389, %v1395
    %v1398 = vsub.f32 %v1279, %v1396
    %v1399 = vmul.f32 %v1252, %v1371
    %v1400 = vmul.f32 %v1254, %v1375
    %v1401 = vmul.f32 %v1256, %v1371
    %v1402 = vmul.f32 %v1258, %v1375
    %v1403 = vmul.f32 %v1262, %v1371
    %v1404 = vmul.f32 %v1264, %v1375
    %v1405 = vmul.f32 %v1266, %v1371
    %v1406 = vmul.f32 %v1268, %v1375
    %v1407 = vmul.f32 %v1272, %v1371
    %v1408 = vmul.f32 %v1274, %v1375
    %v1410 = vlaneseq
    %v1411 = vshrl.u32 %v1410, 7
    %v1412 = vsub.s32 0, %v1411
    %v1413 = vrot.slane %v1398, %v1412
    %v1414 = vlaneseq
    %v1415 = vshrl.u32 %v1414, 7
    %v1416 = vsub.s32 1, %v1415
    %v1417 = vrot.slane %v1398, %v1416
    %v1420 = vadd.f32 %v1399, %v1413
    %v1421 = vadd.f32 %v1400, %v1417
    %v1422 = vadd.f32 %v1401, %v1413
    %v1423 = vadd.f32 %v1402, %v1417
    %v1424 = vadd.f32 %v1403, %v1413
    %v1425 = vadd.f32 %v1404, %v1417
    %v1426 = vadd.f32 %v1405, %v1413
    %v1427 = vadd.f32 %v1406, %v1417
    %v1428 = vadd.f32 %v1407, %v1413
    %v1429 = vadd.f32 %v1408, %v1417
    %v1430 = vmax.f32 %v1420, 0.0
    %v1431 = vmax.f32 %v1421, 0.0
    %v1432 = vmax.f32 %v1422, 0.0
    %v1433 = vmax.f32 %v1423, 0.0
    %v1434 = vmax.f32 %v1424, 0.0
    %v1435 = vmax.f32 %v1425, 0.0
    %v1436 = vmax.f32 %v1426, 0.0
    %v1437 = vmax.f32 %v1427, 0.0
    %v1438 = vmax.f32 %v1428, 0.0
    %v1439 = vmax.f32 %v1429, 0.0
    %v1440 = vld [vmem:[%s11] sm:$0xf]
    %v1441 = vld [vmem:[%s11 + $0x4] sm:$0xf]
    %v1442 = vld [vmem:[%s11 + $0x8] sm:$0xf]
    %v1443 = vld [vmem:[%s11 + $0xc] sm:$0xf]
    %v1444 = vld [vmem:[%s11 + $0x10] sm:$0xf]
    %v1445 = vld [vmem:[%s11 + $0x14] sm:$0xf]
    %v1446 = vld [vmem:[%s11 + $0x18] sm:$0xf]
    %v1447 = vld [vmem:[%s11 + $0x1c] sm:$0xf]
    %v1448 = vld [vmem:[%s11 + $0x20] sm:$0xf]
    %v1449 = vld [vmem:[%s11 + $0x24] sm:$0xf]
    %v1450 = vld [vmem:[%s11 + $0x28] sm:$0xf]
    %v1451 = vld [vmem:[%s11 + $0x2c] sm:$0xf]
    %v1452 = vld [vmem:[%s11 + $0x30] sm:$0xf]
    %v1453 = vld [vmem:[%s11 + $0x34] sm:$0xf]
    %v1454 = vld [vmem:[%s11 + $0x38] sm:$0xf]
    %v1455 = vld [vmem:[%s11 + $0x3c] sm:$0xf]
    %v1456 = vld [vmem:[%s11 + $0x40] sm:$0xf]
    %v1457 = vld [vmem:[%s11 + $0x44] sm:$0xf]
    %v1458 = vld [vmem:[%s11 + $0x48] sm:$0xf]
    %v1459 = vld [vmem:[%s11 + $0x4c] sm:$0xf]
    %v1460 = vld [vmem:[%s11 + $0x50] sm:$0xf]
    %v1461 = vld [vmem:[%s11 + $0x54] sm:$0xf]
    %v1462 = vld [vmem:[%s11 + $0x58] sm:$0xf]
    %v1463 = vld [vmem:[%s11 + $0x5c] sm:$0xf]
    %v1464 = vld [vmem:[%s11 + $0x60] sm:$0xf]
    %v1465 = vld [vmem:[%s11 + $0x64] sm:$0xf]
    %v1466 = vld [vmem:[%s11 + $0x68] sm:$0xf]
    %v1467 = vld [vmem:[%s11 + $0x6c] sm:$0xf]
    %v1468 = vld [vmem:[%s11 + $0x70] sm:$0xf]
    %v1469 = vld [vmem:[%s11 + $0x74] sm:$0xf]
    %v1470 = vld [vmem:[%s11 + $0x78] sm:$0xf]
    %v1471 = vld [vmem:[%s11 + $0x7c] sm:$0xf]
    %v1472 = vld [vmem:[%s12] sm:$0xff]
    %v1473 = vld [vmem:[%s12 + $0x8] sm:$0xff]
    %v1474 = vadd.f32 %v1430, %v1432
    %v1475 = vsel %vm278, %v1434, 0.0
    %v1476 = vadd.f32 %v1474, %v1475
    %v1477 = vrot.slane %v1476, 4
    %v1478 = vadd.f32 %v1476, %v1477
    %v1479 = vrot.slane %v1478, 2
    %v1480 = vadd.f32 %v1478, %v1479
    %v1481 = vrot.slane %v1480, 1
    %v1482 = vadd.f32 %v1480, %v1481
    %v1483 = vadd.f32 %v1431, %v1433
    %v1484 = vsel %vm278, %v1435, 0.0
    %v1485 = vadd.f32 %v1483, %v1484
    %v1486 = vrot.slane %v1485, 4
    %v1487 = vadd.f32 %v1485, %v1486
    %v1488 = vrot.slane %v1487, 2
    %v1489 = vadd.f32 %v1487, %v1488
    %v1490 = vrot.slane %v1489, 1
    %v1491 = vadd.f32 %v1489, %v1490
    %v1492 = vmul.f32 %v1482, %v287
    %v1493 = vmul.f32 %v1491, %v287
    %v1500 = vrot.slane %v1434, 1
    %v1501 = vrot.slane %v1436, 1
    %v1502 = vsel %vm292, %v1500, %v1501
    %v1503 = vrot.slane %v1435, 1
    %v1504 = vrot.slane %v1437, 1
    %v1505 = vsel %vm292, %v1503, %v1504
    %v1506 = vrot.slane %v1438, 1
    %v1507 = vsel %vm292, %v1501, %v1506
    %v1508 = vrot.slane %v1439, 1
    %v1509 = vsel %vm292, %v1504, %v1508
    %v1516 = vadd.f32 %v1502, %v1507
    %v1517 = vsel %vm278, %v1506, 0.0
    %v1518 = vadd.f32 %v1516, %v1517
    %v1519 = vrot.slane %v1518, 4
    %v1520 = vadd.f32 %v1518, %v1519
    %v1521 = vrot.slane %v1520, 2
    %v1522 = vadd.f32 %v1520, %v1521
    %v1523 = vrot.slane %v1522, 1
    %v1524 = vadd.f32 %v1522, %v1523
    %v1525 = vadd.f32 %v1505, %v1509
    %v1526 = vsel %vm278, %v1508, 0.0
    %v1527 = vadd.f32 %v1525, %v1526
    %v1528 = vrot.slane %v1527, 4
    %v1529 = vadd.f32 %v1527, %v1528
    %v1530 = vrot.slane %v1529, 2
    %v1531 = vadd.f32 %v1529, %v1530
    %v1532 = vrot.slane %v1531, 1
    %v1533 = vadd.f32 %v1531, %v1532
    %v1534 = vmul.f32 %v1524, %v287
    %v1535 = vmul.f32 %v1533, %v287
    %v1536 = vsel %vm278, %v1492, %v1534
    %v1537 = vsel %vm278, %v1493, %v1535
    %v1538 = vpack.c.bf16 %v1536, %v1536
    %v1539 = vpack.c.bf16 %v1537, %v1537
    %v1572 = vunpack.c.l.b16 %v1440
    %v1573 = vunpack.c.l.b16 %v1441
    %v1574 = vunpack.c.l.b16 %v1442
    %v1575 = vunpack.c.l.b16 %v1443
    %v1576 = vunpack.c.l.b16 %v1444
    %v1577 = vunpack.c.l.b16 %v1445
    %v1578 = vunpack.c.l.b16 %v1446
    %v1579 = vunpack.c.l.b16 %v1447
    %v1580 = vunpack.c.l.b16 %v1448
    %v1581 = vunpack.c.l.b16 %v1449
    %v1582 = vunpack.c.l.b16 %v1450
    %v1583 = vunpack.c.l.b16 %v1451
    %v1584 = vunpack.c.l.b16 %v1452
    %v1585 = vunpack.c.l.b16 %v1453
    %v1586 = vunpack.c.l.b16 %v1454
    %v1587 = vunpack.c.l.b16 %v1455
    %v1588 = vunpack.c.l.b16 %v1456
    %v1589 = vunpack.c.l.b16 %v1457
    %v1590 = vunpack.c.l.b16 %v1458
    %v1591 = vunpack.c.l.b16 %v1459
    %v1592 = vunpack.c.l.b16 %v1460
    %v1593 = vunpack.c.l.b16 %v1461
    %v1594 = vunpack.c.l.b16 %v1462
    %v1595 = vunpack.c.l.b16 %v1463
    %v1596 = vunpack.c.l.b16 %v1464
    %v1597 = vunpack.c.l.b16 %v1465
    %v1598 = vunpack.c.l.b16 %v1466
    %v1599 = vunpack.c.l.b16 %v1467
    %v1600 = vunpack.c.l.b16 %v1468
    %v1601 = vunpack.c.l.b16 %v1469
    %v1602 = vunpack.c.l.b16 %v1470
    %v1603 = vunpack.c.l.b16 %v1471
    %v1604 = vpack.c.b16 %v1573, %v1572
    %v1605 = vpack.c.b16 %v1575, %v1574
    %v1606 = vpack.c.b16 %v1577, %v1576
    %v1607 = vpack.c.b16 %v1579, %v1578
    %v1608 = vpack.c.b16 %v1581, %v1580
    %v1609 = vpack.c.b16 %v1583, %v1582
    %v1610 = vpack.c.b16 %v1585, %v1584
    %v1611 = vpack.c.b16 %v1587, %v1586
    %v1612 = vpack.c.b16 %v1589, %v1588
    %v1613 = vpack.c.b16 %v1591, %v1590
    %v1614 = vpack.c.b16 %v1593, %v1592
    %v1615 = vpack.c.b16 %v1595, %v1594
    %v1616 = vpack.c.b16 %v1597, %v1596
    %v1617 = vpack.c.b16 %v1599, %v1598
    %v1618 = vpack.c.b16 %v1601, %v1600
    %v1619 = vpack.c.b16 %v1603, %v1602
    %1636 = vmatprep.subr.bf16.mxu0 0
    %1637 = vmatpush1.bf16.msra.mxu0 %v1604
    %1638 = vmatprep.subr.bf16.mxu0 0
    %1639 = vmatpush1.bf16.msra.mxu0 %v1605
    %1640 = vmatprep.subr.bf16.mxu0 0
    %1641 = vmatpush1.bf16.msra.mxu0 %v1606
    %1642 = vmatprep.subr.bf16.mxu0 0
    %1643 = vmatpush1.bf16.msra.mxu0 %v1607
    %1644 = vmatprep.subr.bf16.mxu0 0
    %1645 = vmatpush1.bf16.msra.mxu0 %v1608
    %1646 = vmatprep.subr.bf16.mxu0 0
    %1647 = vmatpush1.bf16.msra.mxu0 %v1609
    %1648 = vmatprep.subr.bf16.mxu0 0
    %1649 = vmatpush1.bf16.msra.mxu0 %v1610
    %1650 = vmatprep.subr.bf16.mxu0 0
    %1651 = vmatpush1.bf16.msra.mxu0 %v1611
    %1652 = vmatprep.subr.bf16.mxu0 0
    %1653 = vmatpush1.bf16.msra.mxu0 %v1612
    %1654 = vmatprep.subr.bf16.mxu0 0
    %1655 = vmatpush1.bf16.msra.mxu0 %v1613
    %1656 = vmatprep.subr.bf16.mxu0 0
    %1657 = vmatpush1.bf16.msra.mxu0 %v1614
    %1658 = vmatprep.subr.bf16.mxu0 0
    %1659 = vmatpush1.bf16.msra.mxu0 %v1615
    %1660 = vmatprep.subr.bf16.mxu0 0
    %1661 = vmatpush1.bf16.msra.mxu0 %v1616
    %1662 = vmatprep.subr.bf16.mxu0 0
    %1663 = vmatpush1.bf16.msra.mxu0 %v1617
    %1664 = vmatprep.subr.bf16.mxu0 0
    %1665 = vmatpush1.bf16.msra.mxu0 %v1618
    %1666 = vmatprep.subr.bf16.mxu0 0
    %1667 = vmatpush1.bf16.msra.mxu0 %v1619
    %1668 = vmatprep.mubr.bf16.mxu0 %v1539
    %1669 = vmatmul.mubr.bf16.gmra.mrb[0].mxu0 %v1538
    %v1670 = vpop.f32.mrb[0].mxu0
    %v1671 = vadd.f32 0.0, %v1670
    %v1672 = vpop.f32.mrb[0].mxu0
    %v1673 = vpop.f32.mrb[0].mxu0
    %v1674 = vpop.f32.mrb[0].mxu0
    %1675 = vdwg.mxu0
    %v1676 = vmax.f32 %v1671, 0.0
    %v1677 = vpack.c.bf16 %v1676, %v1676
    %v1680 = vunpack.c.l.b16 %v1472
    %v1681 = vunpack.c.h.b16 %v1472
    %v1682 = vunpack.c.l.b16 %v1473
    %v1683 = vunpack.c.h.b16 %v1473
    %v1684 = vpack.c.b16 %v1682, %v1680
    %v1685 = vpack.c.b16 %v1683, %v1681
    %vm1688 = vcmask 130048
    %v1690 = vsel %vm1688, %v1677, 0
    %1692 = vmatprep.subr.bf16.mxu0 %v1685
    %1693 = vmatpush1.bf16.msra.mxu0 %v1684
    %1694 = vmatprep.subr.bf16.mxu0 0
    %1695 = vmatpush1.bf16.msra.mxu0 0
    %1696 = vmatprep.subr.bf16.mxu0 0
    %1697 = vmatpush1.bf16.msra.mxu0 0
    %1698 = vmatprep.subr.bf16.mxu0 0
    %1699 = vmatpush1.bf16.msra.mxu0 0
    %1700 = vmatprep.subr.bf16.mxu0 0
    %1701 = vmatpush1.bf16.msra.mxu0 0
    %1702 = vmatprep.subr.bf16.mxu0 0
    %1703 = vmatpush1.bf16.msra.mxu0 0
    %1704 = vmatprep.subr.bf16.mxu0 0
    %1705 = vmatpush1.bf16.msra.mxu0 0
    %1706 = vmatprep.subr.bf16.mxu0 0
    %1707 = vmatpush1.bf16.msra.mxu0 0
    %1708 = vmatprep.subr.bf16.mxu0 0
    %1709 = vmatpush1.bf16.msra.mxu0 0
    %1710 = vmatprep.subr.bf16.mxu0 0
    %1711 = vmatpush1.bf16.msra.mxu0 0
    %1712 = vmatprep.subr.bf16.mxu0 0
    %1713 = vmatpush1.bf16.msra.mxu0 0
    %1714 = vmatprep.subr.bf16.mxu0 0
    %1715 = vmatpush1.bf16.msra.mxu0 0
    %1716 = vmatprep.subr.bf16.mxu0 0
    %1717 = vmatpush1.bf16.msra.mxu0 0
    %1718 = vmatprep.subr.bf16.mxu0 0
    %1719 = vmatpush1.bf16.msra.mxu0 0
    %1720 = vmatprep.subr.bf16.mxu0 0
    %1721 = vmatpush1.bf16.msra.mxu0 0
    %1722 = vmatprep.subr.bf16.mxu0 0
    %1723 = vmatpush1.bf16.msra.mxu0 0
    %1724 = vmatprep.mubr.bf16.mxu0 0
    %1725 = vmatmul.mubr.bf16.gmra.mrb[0].mxu0 %v1690
    %v1726 = vpop.f32.mrb[0].mxu0
    %v1727 = vadd.f32 0.0, %v1726
    %v1728 = vpop.f32.mrb[0].mxu0
    %v1729 = vadd.f32 0.0, %v1728
    %v1730 = vpop.f32.mrb[0].mxu0
    %v1731 = vpop.f32.mrb[0].mxu0
    %1732 = vdwg.mxu0
    %v1733 = vxor.u32 %v1727, 2147483648
    %v1734 = vxor.u32 %v1729, 2147483648
    %v1735 = vmul.f32 %v1733, 1.442695
    %v1736 = vpow.pop %v1735
    %v1737 = vmul.f32 %v1734, 1.442695
    %v1738 = vpow.pop %v1737
    %v1739 = vadd.f32 %v1736, 1.0
    %v1740 = vadd.f32 %v1738, 1.0
    %v1741 = vrcp.pop %v1739
    %v1742 = vmul.f32 1.0, %v1741
    %v1743 = vrcp.pop %v1740
    %v1744 = vmul.f32 1.0, %v1743
    %v1745 = vlaneseq
    %v1746 = vshrl.u32 %v1745, 7
    %v1747 = vsub.s32 0, %v1746
    %v1748 = vrot.slane %v1742, %v1747
    %v1749 = vlaneseq
    %v1750 = vshrl.u32 %v1749, 7
    %v1751 = vsub.s32 0, %v1750
    %v1752 = vrot.slane %v1744, %v1751
    %v1753 = vlaneseq
    %v1754 = vshrl.u32 %v1753, 7
    %v1755 = vsub.s32 1, %v1754
    %v1756 = vrot.slane %v1742, %v1755
    %v1757 = vlaneseq
    %v1758 = vshrl.u32 %v1757, 7
    %v1759 = vsub.s32 1, %v1758
    %v1760 = vrot.slane %v1744, %v1759
    %v1761 = vsel %vm278, %v1748, %v1756
    %v1762 = vsel %vm278, %v1752, %v1760
    %v1763 = vmul.f32 %v1430, %v1748
    %v1764 = vmul.f32 %v1431, %v1752
    %v1765 = vmul.f32 %v1432, %v1748
    %v1766 = vmul.f32 %v1433, %v1752
    %v1767 = vmul.f32 %v1434, %v1761
    %v1768 = vmul.f32 %v1435, %v1762
    %v1769 = vmul.f32 %v1436, %v1756
    %v1770 = vmul.f32 %v1437, %v1760
    %v1771 = vmul.f32 %v1438, %v1756
    %v1772 = vmul.f32 %v1439, %v1760
    %v1773 = vld [vmem:[#allocation7] sm:$0xf]
    %v1774 = vld [vmem:[#allocation7 + $0x4] sm:$0xf]
    %v1775 = vld [vmem:[#allocation7 + $0x8] sm:$0xf]
    %v1776 = vld [vmem:[#allocation7 + $0xc] sm:$0xf]
    %v1777 = vld [vmem:[#allocation7 + $0x10] sm:$0xf]
    %v1778 = vld [vmem:[#allocation7 + $0x14] sm:$0xf]
    %v1779 = vld [vmem:[#allocation7 + $0x18] sm:$0xf]
    %v1780 = vld [vmem:[#allocation7 + $0x1c] sm:$0xf]
    %v1781 = vld [vmem:[#allocation7 + $0x20] sm:$0xf]
    %v1782 = vld [vmem:[#allocation7 + $0x24] sm:$0xf]
    %v1783 = vld [vmem:[#allocation7 + $0x28] sm:$0xf]
    %v1784 = vld [vmem:[#allocation7 + $0x2c] sm:$0xf]
    %v1785 = vld [vmem:[#allocation7 + $0x30] sm:$0xf]
    %v1786 = vld [vmem:[#allocation7 + $0x34] sm:$0xf]
    %v1787 = vld [vmem:[#allocation7 + $0x38] sm:$0xf]
    %v1788 = vld [vmem:[#allocation7 + $0x3c] sm:$0xf]
    %v1789 = vld [vmem:[#allocation7 + $0x40] sm:$0xf]
    %v1790 = vld [vmem:[#allocation7 + $0x44] sm:$0xf]
    %v1791 = vld [vmem:[#allocation7 + $0x48] sm:$0xf]
    %v1792 = vld [vmem:[#allocation7 + $0x4c] sm:$0xf]
    %v1793 = vld [vmem:[#allocation7 + $0x50] sm:$0xf]
    %v1794 = vld [vmem:[#allocation7 + $0x54] sm:$0xf]
    %v1795 = vld [vmem:[#allocation7 + $0x58] sm:$0xf]
    %v1796 = vld [vmem:[#allocation7 + $0x5c] sm:$0xf]
    %v1797 = vld [vmem:[#allocation7 + $0x60] sm:$0xf]
    %v1798 = vld [vmem:[#allocation7 + $0x64] sm:$0xf]
    %v1799 = vld [vmem:[#allocation7 + $0x68] sm:$0xf]
    %v1800 = vld [vmem:[#allocation7 + $0x6c] sm:$0xf]
    %v1801 = vld [vmem:[#allocation7 + $0x70] sm:$0xf]
    %v1802 = vld [vmem:[#allocation7 + $0x74] sm:$0xf]
    %v1803 = vld [vmem:[#allocation7 + $0x78] sm:$0xf]
    %v1804 = vld [vmem:[#allocation7 + $0x7c] sm:$0xf]
    %v1805 = vld [vmem:[#allocation7 + $0x80] sm:$0xf]
    %v1806 = vld [vmem:[#allocation7 + $0x84] sm:$0xf]
    %v1807 = vld [vmem:[#allocation7 + $0x88] sm:$0xf]
    %v1808 = vld [vmem:[#allocation7 + $0x8c] sm:$0xf]
    %v1809 = vld [vmem:[#allocation7 + $0x90] sm:$0xf]
    %v1810 = vld [vmem:[#allocation7 + $0x94] sm:$0xf]
    %v1811 = vld [vmem:[#allocation7 + $0x98] sm:$0xf]
    %v1812 = vld [vmem:[#allocation7 + $0x9c] sm:$0xf]
    %v1813 = vld [vmem:[#allocation7 + $0xa0] sm:$0xf]
    %v1814 = vld [vmem:[#allocation7 + $0xa4] sm:$0xf]
    %v1815 = vld [vmem:[#allocation7 + $0xa8] sm:$0xf]
    %v1816 = vld [vmem:[#allocation7 + $0xac] sm:$0xf]
    %v1817 = vld [vmem:[#allocation7 + $0xb0] sm:$0xf]
    %v1818 = vld [vmem:[#allocation7 + $0xb4] sm:$0xf]
    %v1819 = vld [vmem:[#allocation7 + $0xb8] sm:$0xf]
    %v1820 = vld [vmem:[#allocation7 + $0xbc] sm:$0xf]
    %v1821 = vld [vmem:[#allocation7 + $0xc0] sm:$0xf]
    %v1822 = vld [vmem:[#allocation7 + $0xc4] sm:$0xf]
    %v1823 = vld [vmem:[#allocation7 + $0xc8] sm:$0xf]
    %v1824 = vld [vmem:[#allocation7 + $0xcc] sm:$0xf]
    %v1825 = vld [vmem:[#allocation7 + $0xd0] sm:$0xf]
    %v1826 = vld [vmem:[#allocation7 + $0xd4] sm:$0xf]
    %v1827 = vld [vmem:[#allocation7 + $0xd8] sm:$0xf]
    %v1828 = vld [vmem:[#allocation7 + $0xdc] sm:$0xf]
    %v1829 = vld [vmem:[#allocation7 + $0xe0] sm:$0xf]
    %v1830 = vld [vmem:[#allocation7 + $0xe4] sm:$0xf]
    %v1831 = vld [vmem:[#allocation7 + $0xe8] sm:$0xf]
    %v1832 = vld [vmem:[#allocation7 + $0xec] sm:$0xf]
    %v1833 = vld [vmem:[#allocation7 + $0xf0] sm:$0xf]
    %v1834 = vld [vmem:[#allocation7 + $0xf4] sm:$0xf]
    %v1835 = vld [vmem:[#allocation7 + $0xf8] sm:$0xf]
    %v1836 = vld [vmem:[#allocation7 + $0xfc] sm:$0xf]
    %v1837 = vld [vmem:[#allocation7 + $0x100] sm:$0xf]
    %v1838 = vld [vmem:[#allocation7 + $0x104] sm:$0xf]
    %v1839 = vld [vmem:[#allocation7 + $0x108] sm:$0xf]
    %v1840 = vld [vmem:[#allocation7 + $0x10c] sm:$0xf]
    %v1841 = vld [vmem:[#allocation7 + $0x110] sm:$0xf]
    %v1842 = vld [vmem:[#allocation7 + $0x114] sm:$0xf]
    %v1843 = vld [vmem:[#allocation7 + $0x118] sm:$0xf]
    %v1844 = vld [vmem:[#allocation7 + $0x11c] sm:$0xf]
    %v1845 = vld [vmem:[#allocation7 + $0x120] sm:$0xf]
    %v1846 = vld [vmem:[#allocation7 + $0x124] sm:$0xf]
    %v1847 = vld [vmem:[#allocation7 + $0x128] sm:$0xf]
    %v1848 = vld [vmem:[#allocation7 + $0x12c] sm:$0xf]
    %v1849 = vld [vmem:[#allocation7 + $0x130] sm:$0xf]
    %v1850 = vld [vmem:[#allocation7 + $0x134] sm:$0xf]
    %v1851 = vld [vmem:[#allocation7 + $0x138] sm:$0xf]
    %v1852 = vld [vmem:[#allocation7 + $0x13c] sm:$0xf]
    %v1853 = vld [vmem:[#allocation7 + $0x140] sm:$0xf]
    %v1854 = vld [vmem:[#allocation7 + $0x144] sm:$0xf]
    %v1855 = vld [vmem:[#allocation7 + $0x148] sm:$0xf]
    %v1856 = vld [vmem:[#allocation7 + $0x14c] sm:$0xf]
    %v1857 = vld [vmem:[#allocation7 + $0x150] sm:$0xf]
    %v1858 = vld [vmem:[#allocation7 + $0x154] sm:$0xf]
    %v1859 = vld [vmem:[#allocation7 + $0x158] sm:$0xf]
    %v1860 = vld [vmem:[#allocation7 + $0x15c] sm:$0xf]
    %v1861 = vld [vmem:[#allocation7 + $0x160] sm:$0xf]
    %v1862 = vld [vmem:[#allocation7 + $0x164] sm:$0xf]
    %v1863 = vld [vmem:[#allocation7 + $0x168] sm:$0xf]
    %v1864 = vld [vmem:[#allocation7 + $0x16c] sm:$0xf]
    %v1865 = vld [vmem:[#allocation7 + $0x170] sm:$0xf]
    %v1866 = vld [vmem:[#allocation7 + $0x174] sm:$0xf]
    %v1867 = vld [vmem:[#allocation7 + $0x178] sm:$0xf]
    %v1868 = vld [vmem:[#allocation7 + $0x17c] sm:$0xf]
    %v1869 = vld [vmem:[%s14] sm:$0x1]
    %v1872 = vcombine.low %v1763, %v1764
    %v1874 = vunpack.c.l.s4 1966171168
    %v1875 = vunpack.c.0.s8 %v1874
    %v1876 = vlaneseq
    %v1877 = vshrl.u32 %v1876, 7
    %v1878 = vsub.s32 %v1875, %v1877
    %v1879 = vrot.slane %v1872, %v1878
    %v1881 = vunpack.c.l.s4 1966171168
    %v1882 = vunpack.c.0.s8 %v1881
    %v1883 = vlaneseq
    %v1884 = vshrl.u32 %v1883, 7
    %v1885 = vsub.s32 %v1882, %v1884
    %v1886 = vrot.slane %v1879, %v1885
    %v1888 = vlaneseq
    %vm1889 = vcmp.ge.s32.totalorder %v1888, 0
    %vm1890 = vcmp.lt.s32.totalorder %v1888, 256
    %vm1891 = vmand %vm1889, %vm1890
    %s1892 = scalar_lea.vmem [#allocation3], 7
    %1893 = vst.msk [vmem:[%s1892] ss:$8 sm:$0x3] %vm1891, %v1886
    %1894 = vst.msk [vmem:[%s1892] ss:$8 sm:$0x0] %vm1891, %v1886
    %1895 = vst [vmem:[#allocation3 + $0x10] sm:$0xff] %v1763
    %1896 = vst [vmem:[#allocation3 + $0x18] sm:$0xff] %v1764
    %1897 = vst [vmem:[#allocation3 + $0x20] sm:$0xff] %v1765
    %1898 = vst [vmem:[#allocation3 + $0x28] sm:$0xff] %v1766
    %1899 = vst [vmem:[#allocation3 + $0x30] sm:$0x1] %v1767
    %1900 = vst [vmem:[#allocation3 + $0x38] sm:$0x1] %v1768
    %v1903 = vcombine.low %v1767, %v1768
    %v1905 = vunpack.c.l.s4 1966171168
    %v1906 = vunpack.c.0.s8 %v1905
    %v1907 = vlaneseq
    %v1908 = vshrl.u32 %v1907, 7
    %v1909 = vsub.s32 %v1906, %v1908
    %v1910 = vrot.slane %v1903, %v1909
    %v1912 = vunpack.c.l.s4 1966171168
    %v1913 = vunpack.c.0.s8 %v1912
    %v1914 = vlaneseq
    %v1915 = vshrl.u32 %v1914, 7
    %v1916 = vsub.s32 %v1913, %v1915
    %v1917 = vrot.slane %v1910, %v1916
    %s1919 = scalar_lea.vmem [#allocation3], 49
    %1920 = vst.msk [vmem:[%s1919] ss:$8 sm:$0x3] %vm1891, %v1917
    %1921 = vst.msk [vmem:[%s1919] ss:$8 sm:$0x0] %vm1891, %v1917
    %v1922 = vcombine.high %v1910, %v1910
    %v1924 = vunpack.c.l.s4 1966171168
    %v1925 = vunpack.c.0.s8 %v1924
    %v1926 = vlaneseq
    %v1927 = vshrl.u32 %v1926, 7
    %v1928 = vsub.s32 %v1925, %v1927
    %v1929 = vrot.slane %v1922, %v1928
    %s1931 = scalar_lea.vmem [#allocation3], 64
    %s1932 = scalar_lea.vmem %s1931, 7 [#allocation3]
    %1933 = vst.msk [vmem:[%s1932] ss:$8 sm:$0x3] %vm1891, %v1929
    %1934 = vst.msk [vmem:[%s1932] ss:$8 sm:$0x0] %vm1891, %v1929
    %v1939 = vrot.slane %v1767, 1
    %v1940 = vrot.slane %v1769, 1
    %v1941 = vsel %vm292, %v1939, %v1940
    %v1942 = vrot.slane %v1768, 1
    %v1943 = vrot.slane %v1770, 1
    %v1944 = vsel %vm292, %v1942, %v1943
    %v1945 = vrot.slane %v1771, 1
    %v1946 = vsel %vm292, %v1940, %v1945
    %v1947 = vrot.slane %v1772, 1
    %v1948 = vsel %vm292, %v1943, %v1947
    %1955 = vst [vmem:[%s1931 + $0x10] sm:$0xff] %v1941
    %1956 = vst [vmem:[%s1931 + $0x18] sm:$0xff] %v1944
    %1957 = vst [vmem:[%s1931 + $0x20] sm:$0xff] %v1946
    %1958 = vst [vmem:[%s1931 + $0x28] sm:$0xff] %v1948
    %1959 = vst [vmem:[%s1931 + $0x30] sm:$0x1] %v1945
    %1960 = vst [vmem:[%s1931 + $0x38] sm:$0x1] %v1947
    %v1961 = vcombine.low %v1771, %v1772
    %v1963 = vunpack.c.l.s4 1966171168
    %v1964 = vunpack.c.0.s8 %v1963
    %v1965 = vlaneseq
    %v1966 = vshrl.u32 %v1965, 7
    %v1967 = vsub.s32 %v1964, %v1966
    %v1968 = vrot.slane %v1961, %v1967
    %v1969 = vcombine.high %v1968, %v1968
    %v1971 = vunpack.c.l.s4 1966171168
    %v1972 = vunpack.c.0.s8 %v1971
    %v1973 = vlaneseq
    %v1974 = vshrl.u32 %v1973, 7
    %v1975 = vsub.s32 %v1972, %v1974
    %v1976 = vrot.slane %v1969, %v1975
    %s1978 = scalar_lea.vmem %s1931, 49 [#allocation3]
    %1979 = vst.msk [vmem:[%s1978] ss:$8 sm:$0x3] %vm1891, %v1976
    %1980 = vst.msk [vmem:[%s1978] ss:$8 sm:$0x0] %vm1891, %v1976
    %v1981 = vld [vmem:[#allocation3] sm:$0x80]
    %v1982 = vld [vmem:[#allocation3 + $0x8] sm:$0x80]
    %v1983 = vld [vmem:[#allocation3 + $0x10] sm:$0xff]
    %v1984 = vld [vmem:[#allocation3 + $0x18] sm:$0xff]
    %v1985 = vld [vmem:[#allocation3 + $0x20] sm:$0xff]
    %v1986 = vld [vmem:[#allocation3 + $0x28] sm:$0xff]
    %v1987 = vld [vmem:[#allocation3 + $0x30] sm:$0x1]
    %v1988 = vld [vmem:[#allocation3 + $0x38] sm:$0x1]
    %v1989 = vld [vmem:[#allocation3 + $0x10] sm:$0xfe]
    %v1990 = vld [vmem:[#allocation3 + $0x18] sm:$0xfe]
    %v1991 = vld [vmem:[#allocation3 + $0x30] sm:$0x3]
    %v1992 = vld [vmem:[#allocation3 + $0x38] sm:$0x3]
    %v1999 = vrot.slane %v1983, 1
    %v2000 = vrot.slane %v1984, 1
    %v2001 = vrot.slane %v1985, 1
    %v2002 = vsel %vm292, %v1999, %v2001
    %v2003 = vrot.slane %v1986, 1
    %v2004 = vsel %vm292, %v2000, %v2003
    %v2005 = vrot.slane %v1987, 1
    %v2006 = vsel %vm292, %v2001, %v2005
    %v2007 = vrot.slane %v1988, 1
    %v2008 = vsel %vm292, %v2003, %v2007
    %vm2013 = vcmask 1045504
    %v2014 = vrot.slane %v1989, 2
    %v2015 = vrot.slane %v1990, 2
    %v2016 = vrot.slane %v1985, 2
    %v2017 = vsel %vm2013, %v2014, %v2016
    %v2018 = vrot.slane %v1986, 2
    %v2019 = vsel %vm2013, %v2015, %v2018
    %v2020 = vrot.slane %v1991, 2
    %v2021 = vsel %vm2013, %v2016, %v2020
    %v2022 = vrot.slane %v1992, 2
    %v2023 = vsel %vm2013, %v2018, %v2022
    %v2024 = vld [vmem:[%s1931] sm:$0x80]
    %v2025 = vld [vmem:[%s1931 + $0x8] sm:$0x80]
    %v2026 = vld [vmem:[%s1931 + $0x10] sm:$0xff]
    %v2027 = vld [vmem:[%s1931 + $0x18] sm:$0xff]
    %v2028 = vld [vmem:[%s1931 + $0x20] sm:$0xff]
    %v2029 = vld [vmem:[%s1931 + $0x28] sm:$0xff]
    %v2030 = vld [vmem:[%s1931 + $0x30] sm:$0x1]
    %v2031 = vld [vmem:[%s1931 + $0x38] sm:$0x1]
    %v2032 = vld [vmem:[%s1931 + $0x10] sm:$0xfe]
    %v2033 = vld [vmem:[%s1931 + $0x18] sm:$0xfe]
    %v2034 = vld [vmem:[%s1931 + $0x30] sm:$0x3]
    %v2035 = vld [vmem:[%s1931 + $0x38] sm:$0x3]
    %v2042 = vrot.slane %v2026, 1
    %v2043 = vrot.slane %v2027, 1
    %v2044 = vrot.slane %v2028, 1
    %v2045 = vsel %vm292, %v2042, %v2044
    %v2046 = vrot.slane %v2029, 1
    %v2047 = vsel %vm292, %v2043, %v2046
    %v2048 = vrot.slane %v2030, 1
    %v2049 = vsel %vm292, %v2044, %v2048
    %v2050 = vrot.slane %v2031, 1
    %v2051 = vsel %vm292, %v2046, %v2050
    %v2056 = vrot.slane %v2032, 2
    %v2057 = vrot.slane %v2033, 2
    %v2058 = vrot.slane %v2028, 2
    %v2059 = vsel %vm2013, %v2056, %v2058
    %v2060 = vrot.slane %v2029, 2
    %v2061 = vsel %vm2013, %v2057, %v2060
    %v2062 = vrot.slane %v2034, 2
    %v2063 = vsel %vm2013, %v2058, %v2062
    %v2064 = vrot.slane %v2035, 2
    %v2065 = vsel %vm2013, %v2060, %v2064
    %v2068 = vrot.slane %v1981, 7
    %v2069 = vrot.slane %v1983, 7
    %v2070 = vsel %vm278, %v2068, %v2069
    %v2071 = vrot.slane %v1982, 7
    %v2072 = vrot.slane %v1984, 7
    %v2073 = vsel %vm278, %v2071, %v2072
    %v2074 = vrot.slane %v1999, 7
    %v2075 = vrot.slane %v2002, 7
    %v2076 = vsel %vm278, %v2074, %v2075
    %v2077 = vrot.slane %v2000, 7
    %v2078 = vrot.slane %v2004, 7
    %v2079 = vsel %vm278, %v2077, %v2078
    %v2080 = vrot.slane %v2014, 7
    %v2081 = vrot.slane %v2017, 7
    %v2082 = vsel %vm278, %v2080, %v2081
    %v2083 = vrot.slane %v2015, 7
    %v2084 = vrot.slane %v2019, 7
    %v2085 = vsel %vm278, %v2083, %v2084
    %v2086 = vrot.slane %v1985, 7
    %v2087 = vsel %vm278, %v2069, %v2086
    %v2088 = vrot.slane %v1986, 7
    %v2089 = vsel %vm278, %v2072, %v2088
    %v2090 = vrot.slane %v2006, 7
    %v2091 = vsel %vm278, %v2075, %v2090
    %v2092 = vrot.slane %v2008, 7
    %v2093 = vsel %vm278, %v2078, %v2092
    %v2094 = vrot.slane %v2021, 7
    %v2095 = vsel %vm278, %v2081, %v2094
    %v2096 = vrot.slane %v2023, 7
    %v2097 = vsel %vm278, %v2084, %v2096
    %v2118 = vrot.slane %v2024, 6
    %v2119 = vrot.slane %v2026, 6
    %v2120 = vsel %vm198, %v2118, %v2119
    %v2121 = vrot.slane %v2025, 6
    %v2122 = vrot.slane %v2027, 6
    %v2123 = vsel %vm198, %v2121, %v2122
    %v2124 = vrot.slane %v2042, 6
    %v2125 = vrot.slane %v2045, 6
    %v2126 = vsel %vm198, %v2124, %v2125
    %v2127 = vrot.slane %v2043, 6
    %v2128 = vrot.slane %v2047, 6
    %v2129 = vsel %vm198, %v2127, %v2128
    %v2130 = vrot.slane %v2056, 6
    %v2131 = vrot.slane %v2059, 6
    %v2132 = vsel %vm198, %v2130, %v2131
    %v2133 = vrot.slane %v2057, 6
    %v2134 = vrot.slane %v2061, 6
    %v2135 = vsel %vm198, %v2133, %v2134
    %v2136 = vrot.slane %v2028, 6
    %v2137 = vsel %vm198, %v2119, %v2136
    %v2138 = vrot.slane %v2029, 6
    %v2139 = vsel %vm198, %v2122, %v2138
    %v2140 = vrot.slane %v2049, 6
    %v2141 = vsel %vm198, %v2125, %v2140
    %v2142 = vrot.slane %v2051, 6
    %v2143 = vsel %vm198, %v2128, %v2142
    %v2144 = vrot.slane %v2063, 6
    %v2145 = vsel %vm198, %v2131, %v2144
    %v2146 = vrot.slane %v2065, 6
    %v2147 = vsel %vm198, %v2134, %v2146
    %v2166 = vsel %vm278, %v2086, %v2120
    %v2167 = vsel %vm278, %v2088, %v2123
    %v2168 = vsel %vm278, %v2090, %v2126
    %v2169 = vsel %vm278, %v2092, %v2129
    %v2170 = vsel %vm278, %v2094, %v2132
    %v2171 = vsel %vm278, %v2096, %v2135
    %v2172 = vpack.c.bf16 %v2087, %v2070
    %v2173 = vpack.c.bf16 %v2089, %v2073
    %v2174 = vpack.c.bf16 %v2091, %v2076
    %v2175 = vpack.c.bf16 %v2093, %v2079
    %v2176 = vpack.c.bf16 %v2095, %v2082
    %v2177 = vpack.c.bf16 %v2097, %v2085
    %v2178 = vpack.c.bf16 %v2137, %v2166
    %v2179 = vpack.c.bf16 %v2139, %v2167
    %v2180 = vpack.c.bf16 %v2141, %v2168
    %v2181 = vpack.c.bf16 %v2143, %v2169
    %v2182 = vpack.c.bf16 %v2145, %v2170
    %v2183 = vpack.c.bf16 %v2147, %v2171
    %v2184 = vpack.c.bf16 %v2136, %v2136
    %v2185 = vpack.c.bf16 %v2138, %v2138
    %v2186 = vpack.c.bf16 %v2140, %v2140
    %v2187 = vpack.c.bf16 %v2142, %v2142
    %v2188 = vpack.c.bf16 %v2144, %v2144
    %v2189 = vpack.c.bf16 %v2146, %v2146
    %v2191 = vlaneseq
    %v2192 = vshrl.u32 %v2191, 7
    %v2193 = vsub.s32 0, %v2192
    %v2194 = vrot.slane %v1869, %v2193
    %v2292 = vunpack.c.l.b16 %v1773
    %v2293 = vunpack.c.l.b16 %v1774
    %v2294 = vunpack.c.l.b16 %v1775
    %v2295 = vunpack.c.l.b16 %v1776
    %v2296 = vunpack.c.l.b16 %v1777
    %v2297 = vunpack.c.l.b16 %v1778
    %v2298 = vunpack.c.l.b16 %v1779
    %v2299 = vunpack.c.l.b16 %v1780
    %v2300 = vunpack.c.l.b16 %v1781
    %v2301 = vunpack.c.l.b16 %v1782
    %v2302 = vunpack.c.l.b16 %v1783
    %v2303 = vunpack.c.l.b16 %v1784
    %v2304 = vunpack.c.l.b16 %v1785
    %v2305 = vunpack.c.l.b16 %v1786
    %v2306 = vunpack.c.l.b16 %v1787
    %v2307 = vunpack.c.l.b16 %v1788
    %v2308 = vunpack.c.l.b16 %v1789
    %v2309 = vunpack.c.l.b16 %v1790
    %v2310 = vunpack.c.l.b16 %v1791
    %v2311 = vunpack.c.l.b16 %v1792
    %v2312 = vunpack.c.l.b16 %v1793
    %v2313 = vunpack.c.l.b16 %v1794
    %v2314 = vunpack.c.l.b16 %v1795
    %v2315 = vunpack.c.l.b16 %v1796
    %v2316 = vunpack.c.l.b16 %v1797
    %v2317 = vunpack.c.l.b16 %v1798
    %v2318 = vunpack.c.l.b16 %v1799
    %v2319 = vunpack.c.l.b16 %v1800
    %v2320 = vunpack.c.l.b16 %v1801
    %v2321 = vunpack.c.l.b16 %v1802
    %v2322 = vunpack.c.l.b16 %v1803
    %v2323 = vunpack.c.l.b16 %v1804
    %v2324 = vunpack.c.l.b16 %v1805
    %v2325 = vunpack.c.l.b16 %v1806
    %v2326 = vunpack.c.l.b16 %v1807
    %v2327 = vunpack.c.l.b16 %v1808
    %v2328 = vunpack.c.l.b16 %v1809
    %v2329 = vunpack.c.l.b16 %v1810
    %v2330 = vunpack.c.l.b16 %v1811
    %v2331 = vunpack.c.l.b16 %v1812
    %v2332 = vunpack.c.l.b16 %v1813
    %v2333 = vunpack.c.l.b16 %v1814
    %v2334 = vunpack.c.l.b16 %v1815
    %v2335 = vunpack.c.l.b16 %v1816
    %v2336 = vunpack.c.l.b16 %v1817
    %v2337 = vunpack.c.l.b16 %v1818
    %v2338 = vunpack.c.l.b16 %v1819
    %v2339 = vunpack.c.l.b16 %v1820
    %v2340 = vunpack.c.l.b16 %v1821
    %v2341 = vunpack.c.l.b16 %v1822
    %v2342 = vunpack.c.l.b16 %v1823
    %v2343 = vunpack.c.l.b16 %v1824
    %v2344 = vunpack.c.l.b16 %v1825
    %v2345 = vunpack.c.l.b16 %v1826
    %v2346 = vunpack.c.l.b16 %v1827
    %v2347 = vunpack.c.l.b16 %v1828
    %v2348 = vunpack.c.l.b16 %v1829
    %v2349 = vunpack.c.l.b16 %v1830
    %v2350 = vunpack.c.l.b16 %v1831
    %v2351 = vunpack.c.l.b16 %v1832
    %v2352 = vunpack.c.l.b16 %v1833
    %v2353 = vunpack.c.l.b16 %v1834
    %v2354 = vunpack.c.l.b16 %v1835
    %v2355 = vunpack.c.l.b16 %v1836
    %v2356 = vunpack.c.l.b16 %v1837
    %v2357 = vunpack.c.l.b16 %v1838
    %v2358 = vunpack.c.l.b16 %v1839
    %v2359 = vunpack.c.l.b16 %v1840
    %v2360 = vunpack.c.l.b16 %v1841
    %v2361 = vunpack.c.l.b16 %v1842
    %v2362 = vunpack.c.l.b16 %v1843
    %v2363 = vunpack.c.l.b16 %v1844
    %v2364 = vunpack.c.l.b16 %v1845
    %v2365 = vunpack.c.l.b16 %v1846
    %v2366 = vunpack.c.l.b16 %v1847
    %v2367 = vunpack.c.l.b16 %v1848
    %v2368 = vunpack.c.l.b16 %v1849
    %v2369 = vunpack.c.l.b16 %v1850
    %v2370 = vunpack.c.l.b16 %v1851
    %v2371 = vunpack.c.l.b16 %v1852
    %v2372 = vunpack.c.l.b16 %v1853
    %v2373 = vunpack.c.l.b16 %v1854
    %v2374 = vunpack.c.l.b16 %v1855
    %v2375 = vunpack.c.l.b16 %v1856
    %v2376 = vunpack.c.l.b16 %v1857
    %v2377 = vunpack.c.l.b16 %v1858
    %v2378 = vunpack.c.l.b16 %v1859
    %v2379 = vunpack.c.l.b16 %v1860
    %v2380 = vunpack.c.l.b16 %v1861
    %v2381 = vunpack.c.l.b16 %v1862
    %v2382 = vunpack.c.l.b16 %v1863
    %v2383 = vunpack.c.l.b16 %v1864
    %v2384 = vunpack.c.l.b16 %v1865
    %v2385 = vunpack.c.l.b16 %v1866
    %v2386 = vunpack.c.l.b16 %v1867
    %v2387 = vunpack.c.l.b16 %v1868
    %v2388 = vpack.c.b16 %v2293, %v2292
    %v2389 = vpack.c.b16 %v2295, %v2294
    %v2390 = vpack.c.b16 %v2297, %v2296
    %v2391 = vpack.c.b16 %v2299, %v2298
    %v2392 = vpack.c.b16 %v2301, %v2300
    %v2393 = vpack.c.b16 %v2303, %v2302
    %v2394 = vpack.c.b16 %v2305, %v2304
    %v2395 = vpack.c.b16 %v2307, %v2306
    %v2396 = vpack.c.b16 %v2309, %v2308
    %v2397 = vpack.c.b16 %v2311, %v2310
    %v2398 = vpack.c.b16 %v2313, %v2312
    %v2399 = vpack.c.b16 %v2315, %v2314
    %v2400 = vpack.c.b16 %v2317, %v2316
    %v2401 = vpack.c.b16 %v2319, %v2318
    %v2402 = vpack.c.b16 %v2321, %v2320
    %v2403 = vpack.c.b16 %v2323, %v2322
    %v2404 = vpack.c.b16 %v2325, %v2324
    %v2405 = vpack.c.b16 %v2327, %v2326
    %v2406 = vpack.c.b16 %v2329, %v2328
    %v2407 = vpack.c.b16 %v2331, %v2330
    %v2408 = vpack.c.b16 %v2333, %v2332
    %v2409 = vpack.c.b16 %v2335, %v2334
    %v2410 = vpack.c.b16 %v2337, %v2336
    %v2411 = vpack.c.b16 %v2339, %v2338
    %v2412 = vpack.c.b16 %v2341, %v2340
    %v2413 = vpack.c.b16 %v2343, %v2342
    %v2414 = vpack.c.b16 %v2345, %v2344
    %v2415 = vpack.c.b16 %v2347, %v2346
    %v2416 = vpack.c.b16 %v2349, %v2348
    %v2417 = vpack.c.b16 %v2351, %v2350
    %v2418 = vpack.c.b16 %v2353, %v2352
    %v2419 = vpack.c.b16 %v2355, %v2354
    %v2420 = vpack.c.b16 %v2357, %v2356
    %v2421 = vpack.c.b16 %v2359, %v2358
    %v2422 = vpack.c.b16 %v2361, %v2360
    %v2423 = vpack.c.b16 %v2363, %v2362
    %v2424 = vpack.c.b16 %v2365, %v2364
    %v2425 = vpack.c.b16 %v2367, %v2366
    %v2426 = vpack.c.b16 %v2369, %v2368
    %v2427 = vpack.c.b16 %v2371, %v2370
    %v2428 = vpack.c.b16 %v2373, %v2372
    %v2429 = vpack.c.b16 %v2375, %v2374
    %v2430 = vpack.c.b16 %v2377, %v2376
    %v2431 = vpack.c.b16 %v2379, %v2378
    %v2432 = vpack.c.b16 %v2381, %v2380
    %v2433 = vpack.c.b16 %v2383, %v2382
    %v2434 = vpack.c.b16 %v2385, %v2384
    %v2435 = vpack.c.b16 %v2387, %v2386
    %2484 = vmatprep.subr.bf16.mxu0 0
    %2485 = vmatpush1.bf16.msra.mxu0 %v2388
    %2486 = vmatprep.subr.bf16.mxu0 0
    %2487 = vmatpush1.bf16.msra.mxu0 %v2389
    %2488 = vmatprep.subr.bf16.mxu0 0
    %2489 = vmatpush1.bf16.msra.mxu0 %v2390
    %2490 = vmatprep.subr.bf16.mxu0 0
    %2491 = vmatpush1.bf16.msra.mxu0 %v2391
    %2492 = vmatprep.subr.bf16.mxu0 0
    %2493 = vmatpush1.bf16.msra.mxu0 %v2392
    %2494 = vmatprep.subr.bf16.mxu0 0
    %2495 = vmatpush1.bf16.msra.mxu0 %v2393
    %2496 = vmatprep.subr.bf16.mxu0 0
    %2497 = vmatpush1.bf16.msra.mxu0 %v2394
    %2498 = vmatprep.subr.bf16.mxu0 0
    %2499 = vmatpush1.bf16.msra.mxu0 %v2395
    %2500 = vmatprep.subr.bf16.mxu0 0
    %2501 = vmatpush1.bf16.msra.mxu0 %v2396
    %2502 = vmatprep.subr.bf16.mxu0 0
    %2503 = vmatpush1.bf16.msra.mxu0 %v2397
    %2504 = vmatprep.subr.bf16.mxu0 0
    %2505 = vmatpush1.bf16.msra.mxu0 %v2398
    %2506 = vmatprep.subr.bf16.mxu0 0
    %2507 = vmatpush1.bf16.msra.mxu0 %v2399
    %2508 = vmatprep.subr.bf16.mxu0 0
    %2509 = vmatpush1.bf16.msra.mxu0 %v2400
    %2510 = vmatprep.subr.bf16.mxu0 0
    %2511 = vmatpush1.bf16.msra.mxu0 %v2401
    %2512 = vmatprep.subr.bf16.mxu0 0
    %2513 = vmatpush1.bf16.msra.mxu0 %v2402
    %2514 = vmatprep.subr.bf16.mxu0 0
    %2515 = vmatpush1.bf16.msra.mxu0 %v2403
    %2516 = vmatprep.mubr.bf16.mxu0 %v2173
    %2517 = vmatmul.mubr.bf16.gmra.mrb[0].mxu0 %v2172
    %v2518 = vpop.f32.mrb[0].mxu0
    %v2519 = vadd.f32 %v2194, %v2518
    %v2520 = vpop.f32.mrb[0].mxu0
    %v2521 = vpop.f32.mrb[0].mxu0
    %v2522 = vadd.f32 %v2194, %v2521
    %v2523 = vpop.f32.mrb[0].mxu0
    %2524 = vmatprep.mubr.bf16.mxu0 %v2179
    %2525 = vmatmul.mubr.bf16.gmra.mrb[0].mxu0 %v2178
    %v2526 = vpop.f32.mrb[0].mxu0
    %v2527 = vadd.f32 %v2194, %v2526
    %v2528 = vpop.f32.mrb[0].mxu0
    %v2529 = vpop.f32.mrb[0].mxu0
    %v2530 = vadd.f32 %v2194, %v2529
    %v2531 = vpop.f32.mrb[0].mxu0
    %2532 = vmatprep.mubr.bf16.mxu0 %v2185
    %2533 = vmatmul.mubr.bf16.gmra.mrb[0].mxu0 %v2184
    %v2534 = vpop.f32.mrb[0].mxu0
    %v2535 = vadd.f32 %v2194, %v2534
    %v2536 = vpop.f32.mrb[0].mxu0
    %v2537 = vpop.f32.mrb[0].mxu0
    %v2538 = vpop.f32.mrb[0].mxu0
    %2539 = vdwg.mxu0
    %2540 = vmatprep.subr.bf16.mxu0 0
    %2541 = vmatpush1.bf16.msra.mxu0 %v2404
    %2542 = vmatprep.subr.bf16.mxu0 0
    %2543 = vmatpush1.bf16.msra.mxu0 %v2405
    %2544 = vmatprep.subr.bf16.mxu0 0
    %2545 = vmatpush1.bf16.msra.mxu0 %v2406
    %2546 = vmatprep.subr.bf16.mxu0 0
    %2547 = vmatpush1.bf16.msra.mxu0 %v2407
    %2548 = vmatprep.subr.bf16.mxu0 0
    %2549 = vmatpush1.bf16.msra.mxu0 %v2408
    %2550 = vmatprep.subr.bf16.mxu0 0
    %2551 = vmatpush1.bf16.msra.mxu0 %v2409
    %2552 = vmatprep.subr.bf16.mxu0 0
    %2553 = vmatpush1.bf16.msra.mxu0 %v2410
    %2554 = vmatprep.subr.bf16.mxu0 0
    %2555 = vmatpush1.bf16.msra.mxu0 %v2411
    %2556 = vmatprep.subr.bf16.mxu0 0
    %2557 = vmatpush1.bf16.msra.mxu0 %v2412
    %2558 = vmatprep.subr.bf16.mxu0 0
    %2559 = vmatpush1.bf16.msra.mxu0 %v2413
    %2560 = vmatprep.subr.bf16.mxu0 0
    %2561 = vmatpush1.bf16.msra.mxu0 %v2414
    %2562 = vmatprep.subr.bf16.mxu0 0
    %2563 = vmatpush1.bf16.msra.mxu0 %v2415
    %2564 = vmatprep.subr.bf16.mxu0 0
    %2565 = vmatpush1.bf16.msra.mxu0 %v2416
    %2566 = vmatprep.subr.bf16.mxu0 0
    %2567 = vmatpush1.bf16.msra.mxu0 %v2417
    %2568 = vmatprep.subr.bf16.mxu0 0
    %2569 = vmatpush1.bf16.msra.mxu0 %v2418
    %2570 = vmatprep.subr.bf16.mxu0 0
    %2571 = vmatpush1.bf16.msra.mxu0 %v2419
    %2572 = vmatprep.mubr.bf16.mxu0 %v2175
    %2573 = vmatmul.mubr.bf16.gmra.mrb[0].mxu0 %v2174
    %v2574 = vpop.f32.mrb[0].mxu0
    %v2575 = vadd.f32 %v2519, %v2574
    %v2576 = vpop.f32.mrb[0].mxu0
    %v2577 = vpop.f32.mrb[0].mxu0
    %v2578 = vadd.f32 %v2522, %v2577
    %v2579 = vpop.f32.mrb[0].mxu0
    %2580 = vmatprep.mubr.bf16.mxu0 %v2181
    %2581 = vmatmul.mubr.bf16.gmra.mrb[0].mxu0 %v2180
    %v2582 = vpop.f32.mrb[0].mxu0
    %v2583 = vadd.f32 %v2527, %v2582
    %v2584 = vpop.f32.mrb[0].mxu0
    %v2585 = vpop.f32.mrb[0].mxu0
    %v2586 = vadd.f32 %v2530, %v2585
    %v2587 = vpop.f32.mrb[0].mxu0
    %2588 = vmatprep.mubr.bf16.mxu0 %v2187
    %2589 = vmatmul.mubr.bf16.gmra.mrb[0].mxu0 %v2186
    %v2590 = vpop.f32.mrb[0].mxu0
    %v2591 = vadd.f32 %v2535, %v2590
    %v2592 = vpop.f32.mrb[0].mxu0
    %v2593 = vpop.f32.mrb[0].mxu0
    %v2594 = vpop.f32.mrb[0].mxu0
    %2595 = vdwg.mxu0
    %2596 = vmatprep.subr.bf16.mxu0 0
    %2597 = vmatpush1.bf16.msra.mxu0 %v2420
    %2598 = vmatprep.subr.bf16.mxu0 0
    %2599 = vmatpush1.bf16.msra.mxu0 %v2421
    %2600 = vmatprep.subr.bf16.mxu0 0
    %2601 = vmatpush1.bf16.msra.mxu0 %v2422
    %2602 = vmatprep.subr.bf16.mxu0 0
    %2603 = vmatpush1.bf16.msra.mxu0 %v2423
    %2604 = vmatprep.subr.bf16.mxu0 0
    %2605 = vmatpush1.bf16.msra.mxu0 %v2424
    %2606 = vmatprep.subr.bf16.mxu0 0
    %2607 = vmatpush1.bf16.msra.mxu0 %v2425
    %2608 = vmatprep.subr.bf16.mxu0 0
    %2609 = vmatpush1.bf16.msra.mxu0 %v2426
    %2610 = vmatprep.subr.bf16.mxu0 0
    %2611 = vmatpush1.bf16.msra.mxu0 %v2427
    %2612 = vmatprep.subr.bf16.mxu0 0
    %2613 = vmatpush1.bf16.msra.mxu0 %v2428
    %2614 = vmatprep.subr.bf16.mxu0 0
    %2615 = vmatpush1.bf16.msra.mxu0 %v2429
    %2616 = vmatprep.subr.bf16.mxu0 0
    %2617 = vmatpush1.bf16.msra.mxu0 %v2430
    %2618 = vmatprep.subr.bf16.mxu0 0
    %2619 = vmatpush1.bf16.msra.mxu0 %v2431
    %2620 = vmatprep.subr.bf16.mxu0 0
    %2621 = vmatpush1.bf16.msra.mxu0 %v2432
    %2622 = vmatprep.subr.bf16.mxu0 0
    %2623 = vmatpush1.bf16.msra.mxu0 %v2433
    %2624 = vmatprep.subr.bf16.mxu0 0
    %2625 = vmatpush1.bf16.msra.mxu0 %v2434
    %2626 = vmatprep.subr.bf16.mxu0 0
    %2627 = vmatpush1.bf16.msra.mxu0 %v2435
    %2628 = vmatprep.mubr.bf16.mxu0 %v2177
    %2629 = vmatmul.mubr.bf16.gmra.mrb[0].mxu0 %v2176
    %v2630 = vpop.f32.mrb[0].mxu0
    %v2631 = vadd.f32 %v2575, %v2630
    %v2632 = vpop.f32.mrb[0].mxu0
    %v2633 = vpop.f32.mrb[0].mxu0
    %v2634 = vadd.f32 %v2578, %v2633
    %v2635 = vpop.f32.mrb[0].mxu0
    %2636 = vmatprep.mubr.bf16.mxu0 %v2183
    %2637 = vmatmul.mubr.bf16.gmra.mrb[0].mxu0 %v2182
    %v2638 = vpop.f32.mrb[0].mxu0
    %v2639 = vadd.f32 %v2583, %v2638
    %v2640 = vpop.f32.mrb[0].mxu0
    %v2641 = vpop.f32.mrb[0].mxu0
    %v2642 = vadd.f32 %v2586, %v2641
    %v2643 = vpop.f32.mrb[0].mxu0
    %2644 = vmatprep.mubr.bf16.mxu0 %v2189
    %2645 = vmatmul.mubr.bf16.gmra.mrb[0].mxu0 %v2188
    %v2646 = vpop.f32.mrb[0].mxu0
    %v2647 = vadd.f32 %v2591, %v2646
    %v2648 = vpop.f32.mrb[0].mxu0
    %v2649 = vpop.f32.mrb[0].mxu0
    %v2650 = vpop.f32.mrb[0].mxu0
    %2651 = vdwg.mxu0
    %v2652 = vld [vmem:[%s15] sm:$0x1]
    %v2653 = vld [vmem:[%s16] sm:$0x1]
    %v2654 = vadd.f32 %v2631, %v2634
    %v2655 = vadd.f32 %v2654, %v2639
    %v2656 = vadd.f32 %v2655, %v2642
    %v2657 = vsel %vm198, %v2647, 0.0
    %v2658 = vadd.f32 %v2656, %v2657
    %v2659 = vrot.slane %v2658, 4
    %v2660 = vadd.f32 %v2658, %v2659
    %v2661 = vrot.slane %v2660, 2
    %v2662 = vadd.f32 %v2660, %v2661
    %v2663 = vrot.slane %v2662, 1
    %v2664 = vadd.f32 %v2662, %v2663
    %v2665 = vmul.f32 %v2631, %v2631
    %v2666 = vmul.f32 %v2634, %v2634
    %v2667 = vmul.f32 %v2639, %v2639
    %v2668 = vmul.f32 %v2642, %v2642
    %v2669 = vmul.f32 %v2647, %v2647
    %v2670 = vadd.f32 %v2665, %v2666
    %v2671 = vadd.f32 %v2670, %v2667
    %v2672 = vadd.f32 %v2671, %v2668
    %v2673 = vsel %vm198, %v2669, 0.0
    %v2674 = vadd.f32 %v2672, %v2673
    %v2675 = vrot.slane %v2674, 4
    %v2676 = vadd.f32 %v2674, %v2675
    %v2677 = vrot.slane %v2676, 2
    %v2678 = vadd.f32 %v2676, %v2677
    %v2679 = vrot.slane %v2678, 1
    %v2680 = vadd.f32 %v2678, %v2679
    %v2681 = vmul.f32 %v2664, 0.029411765
    %v2682 = vmul.f32 %v2680, 0.029411765
    %v2683 = vmul.f32 %v2681, %v2681
    %v2684 = vsub.f32 %v2682, %v2683
    %v2685 = vmax.f32 %v2684, 0.0
    %v2686 = vadd.f32 %v2685, 0.001
    %v2687 = vrsqrt.pop %v2686
    %v2688 = vmul.f32 %v2652, %v2687
    %v2689 = vmul.f32 %v2681, %v2688
    %v2690 = vsub.f32 %v2653, %v2689
    %v2692 = vlaneseq
    %v2693 = vshrl.u32 %v2692, 7
    %v2694 = vsub.s32 0, %v2693
    %v2695 = vrot.slane %v2688, %v2694
    %v2697 = vmul.f32 %v2631, %v2695
    %v2698 = vmul.f32 %v2634, %v2695
    %v2699 = vmul.f32 %v2639, %v2695
    %v2700 = vmul.f32 %v2642, %v2695
    %v2701 = vmul.f32 %v2647, %v2695
    %v2703 = vlaneseq
    %v2704 = vshrl.u32 %v2703, 7
    %v2705 = vsub.s32 0, %v2704
    %v2706 = vrot.slane %v2690, %v2705
    %v2708 = vadd.f32 %v2697, %v2706
    %v2709 = vadd.f32 %v2698, %v2706
    %v2710 = vadd.f32 %v2699, %v2706
    %v2711 = vadd.f32 %v2700, %v2706
    %v2712 = vadd.f32 %v2701, %v2706
    %v2713 = vmax.f32 %v2708, 0.0
    %v2714 = vmax.f32 %v2709, 0.0
    %v2715 = vmax.f32 %v2710, 0.0
    %v2716 = vmax.f32 %v2711, 0.0
    %v2717 = vmax.f32 %v2712, 0.0
    %v2718 = vadd.f32 %v2713, %v2714
    %v2719 = vsel %vm278, %v2715, 0.0
    %v2720 = vadd.f32 %v2718, %v2719
    %v2721 = vrot.slane %v2720, 4
    %v2722 = vadd.f32 %v2720, %v2721
    %v2723 = vrot.slane %v2722, 2
    %v2724 = vadd.f32 %v2722, %v2723
    %v2725 = vrot.slane %v2724, 1
    %v2726 = vadd.f32 %v2724, %v2725
    %v2727 = vmul.f32 %v2726, %v287
    %v2731 = vrot.slane %v2715, 1
    %v2732 = vrot.slane %v2716, 1
    %v2733 = vsel %vm292, %v2731, %v2732
    %v2734 = vrot.slane %v2717, 1
    %v2735 = vsel %vm292, %v2732, %v2734
    %v2739 = vadd.f32 %v2733, %v2735
    %v2740 = vsel %vm278, %v2734, 0.0
    %v2741 = vadd.f32 %v2739, %v2740
    %v2742 = vrot.slane %v2741, 4
    %v2743 = vadd.f32 %v2741, %v2742
    %v2744 = vrot.slane %v2743, 2
    %v2745 = vadd.f32 %v2743, %v2744
    %v2746 = vrot.slane %v2745, 1
    %v2747 = vadd.f32 %v2745, %v2746
    %v2748 = vmul.f32 %v2747, %v287
    %v2749 = vsel %vm278, %v2727, %v2748
    %2750 = vst [vmem:[#allocation9] sm:$0x3] %v2749
    // Predicated region
    $region78: #{tpu_custom_call.1} parent=1 // pred_check
      _
    $region79: #{tpu_custom_call.1} parent=1 // pred_check_branch
      %2752 = sbr.rel (0) target = $region81
    $region80: #{tpu_custom_call.1} parent=1 // pred_region
      %s2754 = ssub.s32 32, 32
      %2755 = vsyncadd [#allocation6], %s2754
      %s2757 = sshll.u32 [#allocation9], 4
      %s2758 = int_to_ptr.vmem [resolvable:$true] %s2757
      %2760 = dma.vmem_to_hbm [thread:$0]  %s2758, 32, %s17, [#allocation6]
    $region81: #{tpu_custom_call.1} parent=1 // pred_fallthru
      _
    // Predicated region
    $region82: #{tpu_custom_call.1} parent=1 // pred_check
      _
    $region83: #{tpu_custom_call.1} parent=1 // pred_check_branch
      %2762 = sbr.rel (0) target = $region85
    $region84: #{tpu_custom_call.1} parent=1 // pred_region
      %2763 = dma.done [#allocation6], 32
    $region85: #{tpu_custom_call.1} parent=1 // pred_fallthru
      _
    %2764 = vsyncpa [#allocation5], 1
    %2765 = vsyncpa [#allocation8], 1
    %2766 = vsyncpa [#allocation6], 1

</llo_original>
